<compile_context>
chip_gen: v6e
topology: v6e:2x2x1
jax: 0.10.0
libtpu: 0.0.40
codegen_flags: <defaults>
</compile_context>

<pallas_src>
import math
from functools import partial, lru_cache

import numpy as np
import jax
import jax.numpy as jnp
from jax.experimental import pallas as pl
from jax.experimental.pallas import tpu as pltpu


# --------------------------------------------------------------------------- #
# Helpers                                                                      #
# --------------------------------------------------------------------------- #

def _round_up(x, m):
    return (x + m - 1) // m * m


@lru_cache(maxsize=None)
def _vmem_limits():
    """Generation-aware VMEM limits (v7x: 64 MiB/TC, v5e/v6e: 128 MiB)."""
    cap = 64 * 2 ** 20
    try:
        info = pltpu.get_tpu_info()
        cap_attr = getattr(info, "vmem_capacity_bytes", 0)
        if cap_attr:
            cap = int(cap_attr)
    except Exception:
        pass
    limit = min(int(cap * 0.7), 96 * 2 ** 20)        # scoped limit handed to Mosaic
    budget = min(int(limit * 0.6), 48 * 2 ** 20)     # what the TH search may plan for
    return limit, budget


# --------------------------------------------------------------------------- #
# Fused conv kernel: KxK "same" conv + per-channel scale/shift + optional ReLU #
# --------------------------------------------------------------------------- #

def _conv_kernel(x_hbm, w_ref, sb_ref, o_ref, band, imcol, sem, *,
                 TH, W, Wp, KH, KW, Cin, CK, Ri, BANDF, SUB, img_stride, relu):
    """One grid step computes a TH-row output band for one image.

    x_hbm : (N*Hp*Wp, Cin)        flattened, spatially padded input (HBM / ANY)
    w_ref : (KH, KW*CK, Cout_p)   resident weights (VMEM), kx folded into K
    sb_ref: (2, Cout_p)           row 0 = scale, row 1 = shift (f32, resident)
    o_ref : (1, TH, W, Cout_p)    output block
    band  : (2*BANDF, Cin)        double-buffered input band scratch
    imcol : (Ri, KW*CK)           width-KW im2col scratch (single buffer)
    sem   : DMA((2,))             per-slot DMA semaphores
    """
    n, hb = pl.program_id(0), pl.program_id(1)
    nhb = pl.num_programs(1)
    slot = hb % 2

    def band_copy(row_block, sl):
        start = pl.multiple_of(n * img_stride + row_block * (TH * Wp), SUB)
        dst = pl.multiple_of(sl * BANDF, SUB)
        return pltpu.make_async_copy(
            x_hbm.at[pl.ds(start, BANDF)],
            band.at[pl.ds(dst, BANDF)],
            sem.at[sl])

    # First band of this image (prefetch chain restarts per image so the batch
    # axis can stay "parallel" / megacore-sharded on v7x).
    @pl.when(hb == 0)
    def _():
        band_copy(0, slot).start()

    # Wait for the band this step consumes (started here or at the prev step).
    band_copy(hb, slot).wait()

    # Prefetch the next band of the same image into the other slot.
    @pl.when(hb + 1 < nhb)
    def _():
        band_copy(hb + 1, 1 - slot).start()

    # ---- width-KW im2col: KW lane-aligned (128-padded) channel blocks. ----
    if Cin < CK:
        # Padded lanes feed zero weights but must not hold NaN/Inf garbage.
        imcol[...] = jnp.zeros_like(imcol)
    src0 = pl.multiple_of(slot * BANDF, SUB)
    for kx in range(KW):
        imcol[:, kx * CK: kx * CK + Cin] = band[pl.ds(src0 + kx, Ri), :]

    # ---- KH MXU matmuls (K = KW*CK), accumulated in values, stored once. ----
    R = TH * Wp
    acc = None
    for ky in range(KH):
        lhs = imcol[ky * Wp: ky * Wp + R, :]          # static, sublane-aligned
        d = jnp.dot(lhs, w_ref[ky], preferred_element_type=jnp.float32)
        acc = d if acc is None else acc + d

    # Epilogue: fused scale/shift (+ReLU), drop junk columns, single store.
    y = acc * sb_ref[0:1, :] + sb_ref[1:2, :]
    if relu:
        y = jnp.maximum(y, 0.0)
    y = y.reshape(TH, Wp, -1)[:, :W, :]
    o_ref[0] = y.astype(o_ref.dtype)


def conv2d_fused(x_nhwc, w_hwio, shift, scale=None, *, relu=False,
                 out_dtype=None, compute_dtype=jnp.bfloat16):
    """y = [relu]( conv_same(x, w) * scale + shift ), NHWC in / NHWC out.

    Returns an array with Cout zero-padded up to a multiple of 128 (lane-dense
    stores); the padded channels are exactly zero, so they can be carried
    through subsequent convs / pools and sliced off at the very end.
    """
    N, H, W, Cx = x_nhwc.shape
    KH, KW, Cw, Cout = w_hwio.shape
    assert KH == KW and KH in (1, 3)
    pad = (KH - 1) // 2
    out_dtype = out_dtype if out_dtype is not None else x_nhwc.dtype
    Cout_p = _round_up(Cout, 128)
    CK = _round_up(Cx, 128)                     # lane-aligned im2col block width

    cbytes = np.dtype(compute_dtype).itemsize
    obytes = np.dtype(out_dtype).itemsize
    SUB = 8 * (4 // cbytes)                     # 8 rows (f32) / 16 rows (bf16)

    vmem_limit, vmem_budget = _vmem_limits()

    # ---- weights: (KH, KW*CK, Cout_p), zero-padded, VMEM-resident ----
    w = w_hwio
    if Cx > Cw:                                 # carried zero channels
        w = jnp.pad(w, ((0, 0), (0, 0), (0, Cx - Cw), (0, 0)))
    w = jnp.pad(w, ((0, 0), (0, 0), (0, CK - Cx), (0, Cout_p - Cout)))
    w = w.reshape(KH, KW * CK, Cout_p).astype(compute_dtype)

    if scale is None:
        scale = jnp.ones((Cout,), jnp.float32)
    sb = jnp.stack([
        jnp.pad(scale.astype(jnp.float32), (0, Cout_p - Cout), constant_values=1.0),
        jnp.pad(shift.astype(jnp.float32), (0, Cout_p - Cout)),
    ])                                          # (2, Cout_p)

    # ---- spatial halo: Wp rounded to the sublane multiple so every ky*Wp
    #      offset / DMA start is aligned; extra_h rows absorb the over-read of
    #      the last (rounded-up) band. ----
    Wp = _round_up(W + 2 * pad, SUB)
    extra_h = -(-(KW + SUB - 2) // Wp)
    Hp = H + 2 * pad + extra_h
    xq = jnp.pad(x_nhwc.astype(compute_dtype),
                 ((0, 0), (pad, pad + extra_h), (pad, Wp - W - pad), (0, 0)))
    x_flat = xq.reshape(N * Hp * Wp, Cx)        # metadata-only reshape

    # ---- TH search with a physical (lane/sublane-padded) VMEM model ----
    def vmem_need(th):
        ri = (th + KH - 1) * Wp
        bandf = _round_up(ri + KW - 1, SUB)
        r = th * Wp
        return (2 * bandf * _round_up(Cx, 128) * cbytes       # band double buffer
                + ri * KW * CK * cbytes                       # im2col scratch
                + 2 * KH * KW * CK * Cout_p * cbytes          # resident weights
                + 2 * 8 * Cout_p * 4                          # scale/shift
                + 2 * th * _round_up(W, 8) * Cout_p * obytes  # output double buffer
                + 3 * r * Cout_p * 4                          # f32 value accumulation
                + (2 << 20))                                  # Mosaic internal scratch

    TH = 1
    for th in range(H, 0, -1):
        if H % th == 0 and vmem_need(th) <= vmem_budget:
            TH = th
            break
    nhb = H // TH
    Ri = (TH + KH - 1) * Wp
    BANDF = _round_up(Ri + KW - 1, SUB)

    kern = partial(_conv_kernel, TH=TH, W=W, Wp=Wp, KH=KH, KW=KW,
                   Cin=Cx, CK=CK, Ri=Ri, BANDF=BANDF, SUB=SUB,
                   img_stride=Hp * Wp, relu=relu)

    return pl.pallas_call(
        kern,
        out_shape=jax.ShapeDtypeStruct((N, H, W, Cout_p), out_dtype),
        grid_spec=pltpu.PrefetchScalarGridSpec(
            num_scalar_prefetch=0,
            grid=(N, nhb),
            in_specs=[
                pl.BlockSpec(memory_space=pl.ANY),                        # x (HBM)
                pl.BlockSpec((KH, KW * CK, Cout_p), lambda n, h: (0, 0, 0)),
                pl.BlockSpec((2, Cout_p), lambda n, h: (0, 0)),
            ],
            out_specs=pl.BlockSpec((1, TH, W, Cout_p), lambda n, h: (n, h, 0, 0)),
            scratch_shapes=[
                pltpu.VMEM((2 * BANDF, Cx), compute_dtype),   # input band (2 slots)
                pltpu.VMEM((Ri, KW * CK), compute_dtype),     # im2col band
                pltpu.SemaphoreType.DMA((2,)),
            ],
        ),
        compiler_params=pltpu.CompilerParams(
            dimension_semantics=("parallel", "arbitrary"),
            vmem_limit_bytes=vmem_limit,
        ),
    )(x_flat, w, sb)


# --------------------------------------------------------------------------- #
# Parameters                                                                   #
# --------------------------------------------------------------------------- #

def init_retinanet_params(key, in_channels, n_classes, n_anchors,
                          n_filters=(32, 64, 128, 256), backbone_out=256,
                          prior_probability=0.01):
    keys = iter(jax.random.split(key, 32))

    def conv_w(cin, cout, k=3, std=None):
        std = std if std is not None else (2.0 / (k * k * cin)) ** 0.5
        return (std * jax.random.normal(next(keys), (k, k, cin, cout))).astype(jnp.float32)

    def bn(c):
        return {"gamma": jnp.ones((c,), jnp.float32), "beta": jnp.zeros((c,), jnp.float32),
                "mean": jnp.zeros((c,), jnp.float32), "var": jnp.ones((c,), jnp.float32)}

    def block(cin, cout):
        return {"w1": conv_w(cin, cout), "bn1": bn(cout),
                "w2": conv_w(cout, cout), "bn2": bn(cout)}

    params = {
        "enc1": block(in_channels, n_filters[0]),
        "enc2": block(n_filters[0], n_filters[1]),
        "enc3": block(n_filters[1], n_filters[2]),
        "enc4": block(n_filters[2], n_filters[3]),
        "out_w": conv_w(n_filters[3], backbone_out, k=1),
        "out_b": jnp.zeros((backbone_out,), jnp.float32),
    }
    # Head (matches the PyTorch init: std=0.01 weights, zero / prior biases).
    c = backbone_out
    params["cls_convs"] = [(conv_w(c, c, std=0.01), jnp.zeros((c,), jnp.float32))
                           for _ in range(4)]
    params["cls_final_w"] = conv_w(c, n_classes * n_anchors, std=0.01)
    params["cls_final_b"] = jnp.full(
        (n_classes * n_anchors,),
        -math.log((1.0 - prior_probability) / prior_probability), jnp.float32)
    params["reg_convs"] = [(conv_w(c, c, std=0.01), jnp.zeros((c,), jnp.float32))
                           for _ in range(4)]
    params["reg_final_w"] = conv_w(c, 4 * n_anchors, std=0.01)
    params["reg_final_b"] = jnp.zeros((4 * n_anchors,), jnp.float32)
    return params


# --------------------------------------------------------------------------- #
# Forward pass                                                                 #
# --------------------------------------------------------------------------- #

def _bn_fold(bn, eps=1e-5):
    scale = bn["gamma"] / jnp.sqrt(bn["var"] + eps)
    shift = bn["beta"] - bn["mean"] * scale
    return scale, shift


def _block_forward(x, p, cdt):
    s1, t1 = _bn_fold(p["bn1"])
    s2, t2 = _bn_fold(p["bn2"])
    x = conv2d_fused(x, p["w1"], t1, s1, relu=True, out_dtype=cdt, compute_dtype=cdt)
    x = conv2d_fused(x, p["w2"], t2, s2, relu=True, out_dtype=cdt, compute_dtype=cdt)
    return x


def _maxpool2x2(x):
    N, H, W, C = x.shape
    return jnp.max(x.reshape(N, H // 2, 2, W // 2, 2, C), axis=(2, 4))


def head_forward(params, feats_nhwc, n_classes, compute_dtype=jnp.bfloat16):
    all_cls, all_reg = [], []
    cdt = compute_dtype
    for f in feats_nhwc:
        def tower(x, convs, fw, fb):
            h = x
            for w, b in convs:
                h = conv2d_fused(h, w, b, relu=True, out_dtype=cdt, compute_dtype=cdt)
            return conv2d_fused(h, fw, fb, relu=False,
                                out_dtype=jnp.float32, compute_dtype=cdt)

        cls = tower(f, params["cls_convs"], params["cls_final_w"], params["cls_final_b"])
        reg = tower(f, params["reg_convs"], params["reg_final_w"], params["reg_final_b"])
        N, H, W, _ = cls.shape
        ck = params["cls_final_w"].shape[-1]   # n_classes * n_anchors
        c4 = params["reg_final_w"].shape[-1]   # 4 * n_anchors
        all_cls.append(cls[..., :ck].reshape(N, H * W * (ck // n_classes), n_classes))
        all_reg.append(reg[..., :c4].reshape(N, H * W * (c4 // 4), 4))
    return jnp.concatenate(all_cls, axis=1), jnp.concatenate(all_reg, axis=1)


def retinanet_forward(params, x_nchw, n_classes, compute_dtype=jnp.bfloat16):
    cdt = compute_dtype
    x = jnp.transpose(x_nchw, (0, 2, 3, 1))            # NCHW -> NHWC
    # UNet backbone
    e1 = _block_forward(x, params["enc1"], cdt)
    e2 = _block_forward(_maxpool2x2(e1), params["enc2"], cdt)
    e3 = _block_forward(_maxpool2x2(e2), params["enc3"], cdt)
    e4 = _block_forward(_maxpool2x2(e3), params["enc4"], cdt)
    feat = conv2d_fused(e4, params["out_w"], params["out_b"], relu=False,
                        out_dtype=jnp.float32, compute_dtype=cdt)
    feat = feat[..., :params["out_w"].shape[-1]]       # (no-op: 256 is lane-aligned)
    # Head on the single backbone feature
    cls_logits, bbox_reg = head_forward(params, [feat], n_classes, cdt)
    features = [jnp.transpose(feat, (0, 3, 1, 2))]     # NHWC -> NCHW (module layout)
    return features, cls_logits, bbox_reg


# --------------------------------------------------------------------------- #
# Main                                                                         #
# --------------------------------------------------------------------------- #

if __name__ == "__main__":
    in_channels, n_classes, n_anchors = 4, 3, 2
    N, S = 2, 32

    root = jax.random.PRNGKey(0)
    kp, kx, k1, k2, k3 = jax.random.split(root, 5)

    def conv_ref(x, w, b, relu):
        y = jax.lax.conv_general_dilated(
            x, w, (1, 1), "SAME",
            dimension_numbers=("NHWC", "HWIO", "NHWC")) + b
        return jnp.maximum(y, 0.0) if relu else y

    # ---- self-check (a): f32 path, narrow Cin (lane-padded im2col blocks) ----
    xt = jax.random.normal(k1, (2, 8, 12, 5), jnp.float32)
    wt = 0.1 * jax.random.normal(k2, (3, 3, 5, 7), jnp.float32)
    bt = jax.random.normal(k3, (7,), jnp.float32)
    got = conv2d_fused(xt, wt, bt, relu=True,
                       out_dtype=jnp.float32, compute_dtype=jnp.float32)[..., :7]
    ref = conv_ref(xt, wt, bt, True)
    assert jnp.allclose(got, ref, atol=3e-2, rtol=3e-2), \
        float(jnp.max(jnp.abs(got - ref)))

    # ---- self-check (b): bf16 path, lane-aligned Cin (model-layer layout) ----
    xb = jax.random.normal(k1, (1, 8, 8, 128), jnp.float32)
    wb = 0.05 * jax.random.normal(k2, (3, 3, 128, 16), jnp.float32)
    bb = jax.random.normal(k3, (16,), jnp.float32)
    got_b = conv2d_fused(xb, wb, bb, relu=False,
                         out_dtype=jnp.float32, compute_dtype=jnp.bfloat16)[..., :16]
    ref_b = conv_ref(xb.astype(jnp.bfloat16).astype(jnp.float32),
                     wb.astype(jnp.bfloat16).astype(jnp.float32), bb, False)
    assert jnp.allclose(got_b, ref_b, atol=8e-2, rtol=8e-2), \
        float(jnp.max(jnp.abs(got_b - ref_b)))

    # ---- full RetinaNet forward (bf16 activations, f32 accumulation) ----
    params = init_retinanet_params(kp, in_channels, n_classes, n_anchors)
    x = jax.random.normal(kx, (N, in_channels, S, S), jnp.float32)

    fwd = jax.jit(partial(retinanet_forward, n_classes=n_classes))
    features, cls_out, reg_out = fwd(params, x)
    jax.block_until_ready((features, cls_out, reg_out))

    Hf = S // 8                                   # three 2x2 max-pools
    n_pos = Hf * Hf * n_anchors
    assert features[0].shape == (N, 256, Hf, Hf), features[0].shape
    assert cls_out.shape == (N, n_pos, n_classes), cls_out.shape
    assert reg_out.shape == (N, n_pos, 4), reg_out.shape
    assert bool(jnp.all(jnp.isfinite(cls_out))) and bool(jnp.all(jnp.isfinite(reg_out)))

    print("KERNEL_OK")
</pallas_src>

<mosaic_0001>
module attributes {stable_mosaic.version = 11 : i64} {
  func.func @_conv_kernel(%arg0: i32, %arg1: i32, %arg2: memref<352x5xf32, #tpu.memory_space<any>>, %arg3: memref<3x384x128xf32, #tpu.memory_space<vmem>>, %arg4: memref<2x128xf32, #tpu.memory_space<vmem>>, %arg5: memref<1x8x12x128xf32, #tpu.memory_space<vmem>>, %arg6: memref<336x5xf32, #tpu.memory_space<vmem>>, %arg7: memref<160x384xf32, #tpu.memory_space<vmem>>, %arg8: memref<2x!tpu.dma_semaphore, #tpu.memory_space<semaphore_mem>>) attributes {dimension_semantics = [#tpu.dimension_semantics<parallel>, #tpu.dimension_semantics<arbitrary>], iteration_bounds = array<i64: 2, 1>, scalar_prefetch = 0 : i64, scratch_operands = 3 : i64, tpu.core_type = #tpu.core_type<tc>, window_params = [{}, {pipeline_mode = #tpu.pipeline_mode<synchronous>, transform_indices = @transform_1, window_bounds = array<i64: 3, 384, 128>}, {pipeline_mode = #tpu.pipeline_mode<synchronous>, transform_indices = @transform_2, window_bounds = array<i64: 2, 128>}, {transform_indices = @transform_3, window_bounds = array<i64: 1, 8, 12, 128>}]} {
    %c2_i32 = arith.constant 2 : i32
    %c0_i32 = arith.constant 0 : i32
    %0 = arith.cmpi eq, %c2_i32, %c0_i32 : i32
    %c1_i32 = arith.constant 1 : i32
    %1 = arith.select %0, %c1_i32, %c2_i32 : i32
    %2 = arith.remsi %arg1, %1 : i32
    %c0_i32_0 = arith.constant 0 : i32
    %3 = arith.cmpi ne, %2, %c0_i32_0 : i32
    %c0_i32_1 = arith.constant 0 : i32
    %4 = arith.cmpi slt, %2, %c0_i32_1 : i32
    %c0_i32_2 = arith.constant 0 : i32
    %5 = arith.cmpi slt, %1, %c0_i32_2 : i32
    %6 = arith.xori %4, %5 : i1
    %7 = arith.andi %6, %3 : i1
    %8 = arith.addi %2, %1 : i32
    %9 = arith.select %7, %8, %2 : i32
    %c0_i32_3 = arith.constant 0 : i32
    %10 = arith.cmpi eq, %arg1, %c0_i32_3 : i32
    %11 = arith.extui %10 : i1 to i32
    %c0_i32_4 = arith.constant 0 : i32
    %12 = arith.cmpi ne, %11, %c0_i32_4 : i32
    scf.if %12 {
      %c176_i32_45 = arith.constant 176 : i32
      %70 = arith.muli %arg0, %c176_i32_45 : i32
      %c0_i32_46 = arith.constant 0 : i32
      %71 = arith.addi %70, %c0_i32_46 : i32
      %72 = tpu.assume_multiple %71, 8 : i32
      %c168_i32_47 = arith.constant 168 : i32
      %73 = arith.muli %9, %c168_i32_47 : i32
      %74 = tpu.assume_multiple %73, 8 : i32
      %c0_i32_48 = arith.constant 0 : i32
      %75 = tpu.memref_slice %arg2[%72, %c0_i32_48] : memref<352x5xf32, #tpu.memory_space<any>> -> memref<168x5xf32, #tpu.memory_space<any>>
      %c0_i32_49 = arith.constant 0 : i32
      %76 = tpu.memref_slice %arg6[%74, %c0_i32_49] : memref<336x5xf32, #tpu.memory_space<vmem>> -> memref<168x5xf32, #tpu.memory_space<vmem>>
      %77 = tpu.memref_slice %arg8[%9] : memref<2x!tpu.dma_semaphore, #tpu.memory_space<semaphore_mem>> -> memref<1x!tpu.dma_semaphore, #tpu.memory_space<semaphore_mem>>
      %78 = tpu.memref_squeeze %77 : memref<1x!tpu.dma_semaphore, #tpu.memory_space<semaphore_mem>> -> memref<!tpu.dma_semaphore, #tpu.memory_space<semaphore_mem>>
      tpu.enqueue_dma source(%75 : memref<168x5xf32, #tpu.memory_space<any>>) target(%76 : memref<168x5xf32, #tpu.memory_space<vmem>>) target_semaphore(%78 : memref<!tpu.dma_semaphore, #tpu.memory_space<semaphore_mem>>)
    } else {
    }
    %c176_i32 = arith.constant 176 : i32
    %13 = arith.muli %arg0, %c176_i32 : i32
    %c128_i32 = arith.constant 128 : i32
    %14 = arith.muli %arg1, %c128_i32 : i32
    %15 = arith.addi %13, %14 : i32
    %16 = tpu.assume_multiple %15, 8 : i32
    %c168_i32 = arith.constant 168 : i32
    %17 = arith.muli %9, %c168_i32 : i32
    %18 = tpu.assume_multiple %17, 8 : i32
    %c0_i32_5 = arith.constant 0 : i32
    %19 = tpu.memref_slice %arg2[%16, %c0_i32_5] : memref<352x5xf32, #tpu.memory_space<any>> -> memref<168x5xf32, #tpu.memory_space<any>>
    %c0_i32_6 = arith.constant 0 : i32
    %20 = tpu.memref_slice %arg6[%18, %c0_i32_6] : memref<336x5xf32, #tpu.memory_space<vmem>> -> memref<168x5xf32, #tpu.memory_space<vmem>>
    %21 = tpu.memref_slice %arg8[%9] : memref<2x!tpu.dma_semaphore, #tpu.memory_space<semaphore_mem>> -> memref<1x!tpu.dma_semaphore, #tpu.memory_space<semaphore_mem>>
    %22 = tpu.memref_squeeze %21 : memref<1x!tpu.dma_semaphore, #tpu.memory_space<semaphore_mem>> -> memref<!tpu.dma_semaphore, #tpu.memory_space<semaphore_mem>>
    tpu.wait_dma2 semaphore(%22 : memref<!tpu.dma_semaphore, #tpu.memory_space<semaphore_mem>>) src(%19 : memref<168x5xf32, #tpu.memory_space<any>>) dst(%20 : memref<168x5xf32, #tpu.memory_space<vmem>>)
    %c1_i32_7 = arith.constant 1 : i32
    %23 = arith.addi %arg1, %c1_i32_7 : i32
    %c1_i32_8 = arith.constant 1 : i32
    %24 = arith.cmpi slt, %23, %c1_i32_8 : i32
    %25 = arith.extui %24 : i1 to i32
    %c0_i32_9 = arith.constant 0 : i32
    %26 = arith.cmpi ne, %25, %c0_i32_9 : i32
    scf.if %26 {
      %c1_i32_45 = arith.constant 1 : i32
      %70 = arith.addi %arg1, %c1_i32_45 : i32
      %c1_i32_46 = arith.constant 1 : i32
      %71 = arith.subi %c1_i32_46, %9 : i32
      %c176_i32_47 = arith.constant 176 : i32
      %72 = arith.muli %arg0, %c176_i32_47 : i32
      %c128_i32_48 = arith.constant 128 : i32
      %73 = arith.muli %70, %c128_i32_48 : i32
      %74 = arith.addi %72, %73 : i32
      %75 = tpu.assume_multiple %74, 8 : i32
      %c168_i32_49 = arith.constant 168 : i32
      %76 = arith.muli %71, %c168_i32_49 : i32
      %77 = tpu.assume_multiple %76, 8 : i32
      %c0_i32_50 = arith.constant 0 : i32
      %78 = tpu.memref_slice %arg2[%75, %c0_i32_50] : memref<352x5xf32, #tpu.memory_space<any>> -> memref<168x5xf32, #tpu.memory_space<any>>
      %c0_i32_51 = arith.constant 0 : i32
      %79 = tpu.memref_slice %arg6[%77, %c0_i32_51] : memref<336x5xf32, #tpu.memory_space<vmem>> -> memref<168x5xf32, #tpu.memory_space<vmem>>
      %80 = tpu.memref_slice %arg8[%71] : memref<2x!tpu.dma_semaphore, #tpu.memory_space<semaphore_mem>> -> memref<1x!tpu.dma_semaphore, #tpu.memory_space<semaphore_mem>>
      %81 = tpu.memref_squeeze %80 : memref<1x!tpu.dma_semaphore, #tpu.memory_space<semaphore_mem>> -> memref<!tpu.dma_semaphore, #tpu.memory_space<semaphore_mem>>
      tpu.enqueue_dma source(%78 : memref<168x5xf32, #tpu.memory_space<any>>) target(%79 : memref<168x5xf32, #tpu.memory_space<vmem>>) target_semaphore(%81 : memref<!tpu.dma_semaphore, #tpu.memory_space<semaphore_mem>>)
    } else {
    }
    %cst = arith.constant 0.000000e+00 : f32
    %27 = vector.broadcast %cst : f32 to vector<160x384xf32>
    %c0 = arith.constant 0 : index
    %c0_10 = arith.constant 0 : index
    %28 = vector.load %arg7[%c0, %c0_10] : memref<160x384xf32, #tpu.memory_space<vmem>>, vector<160x384xf32>
    tpu.vector_store %arg7[%c0, %c0_10], %27 {strides = array<i32>} : memref<160x384xf32, #tpu.memory_space<vmem>>, vector<160x384xf32>,
    %c168_i32_11 = arith.constant 168 : i32
    %29 = arith.muli %9, %c168_i32_11 : i32
    %30 = tpu.assume_multiple %29, 8 : i32
    %c0_i32_12 = arith.constant 0 : i32
    %31 = arith.addi %30, %c0_i32_12 : i32
    %32 = arith.index_cast %31 : i32 to index
    %c0_13 = arith.constant 0 : index
    %33 = vector.load %arg6[%32, %c0_13] : memref<336x5xf32, #tpu.memory_space<vmem>>, vector<160x5xf32>
    %c0_14 = arith.constant 0 : index
    %c0_15 = arith.constant 0 : index
    %34 = vector.load %arg7[%c0_14, %c0_15] : memref<160x384xf32, #tpu.memory_space<vmem>>, vector<160x5xf32>
    tpu.vector_store %arg7[%c0_14, %c0_15], %33 {strides = array<i32>} : memref<160x384xf32, #tpu.memory_space<vmem>>, vector<160x5xf32>,
    %c1_i32_16 = arith.constant 1 : i32
    %35 = arith.addi %30, %c1_i32_16 : i32
    %36 = arith.index_cast %35 : i32 to index
    %c0_17 = arith.constant 0 : index
    %37 = vector.load %arg6[%36, %c0_17] : memref<336x5xf32, #tpu.memory_space<vmem>>, vector<160x5xf32>
    %c0_18 = arith.constant 0 : index
    %c128 = arith.constant 128 : index
    %38 = vector.load %arg7[%c0_18, %c128] : memref<160x384xf32, #tpu.memory_space<vmem>>, vector<160x5xf32>
    tpu.vector_store %arg7[%c0_18, %c128], %37 {strides = array<i32>} : memref<160x384xf32, #tpu.memory_space<vmem>>, vector<160x5xf32>,
    %c2_i32_19 = arith.constant 2 : i32
    %39 = arith.addi %30, %c2_i32_19 : i32
    %40 = arith.index_cast %39 : i32 to index
    %c0_20 = arith.constant 0 : index
    %41 = vector.load %arg6[%40, %c0_20] : memref<336x5xf32, #tpu.memory_space<vmem>>, vector<160x5xf32>
    %c0_21 = arith.constant 0 : index
    %c256 = arith.constant 256 : index
    %42 = vector.load %arg7[%c0_21, %c256] : memref<160x384xf32, #tpu.memory_space<vmem>>, vector<160x5xf32>
    tpu.vector_store %arg7[%c0_21, %c256], %41 {strides = array<i32>} : memref<160x384xf32, #tpu.memory_space<vmem>>, vector<160x5xf32>,
    %c0_22 = arith.constant 0 : index
    %c0_23 = arith.constant 0 : index
    %43 = vector.load %arg7[%c0_22, %c0_23] : memref<160x384xf32, #tpu.memory_space<vmem>>, vector<128x384xf32>
    %c0_24 = arith.constant 0 : index
    %c0_25 = arith.constant 0 : index
    %c0_26 = arith.constant 0 : index
    %44 = vector.load %arg3[%c0_24, %c0_25, %c0_26] : memref<3x384x128xf32, #tpu.memory_space<vmem>>, vector<1x384x128xf32>
    %45 = vector.shape_cast %44 : vector<1x384x128xf32> to vector<384x128xf32>
    %cst_27 = arith.constant dense<0.000000e+00> : vector<128x128xf32>
    %46 = tpu.matmul %43, %45, %cst_27 {dimension_numbers = #tpu.dot_dimension_numbers<[1], [0], [0], [1], [0, 0, 1, 1], [], []>} : vector<128x384xf32>, vector<384x128xf32>, vector<128x128xf32> -> vector<128x128xf32>
    %c16 = arith.constant 16 : index
    %c0_28 = arith.constant 0 : index
    %47 = vector.load %arg7[%c16, %c0_28] : memref<160x384xf32, #tpu.memory_space<vmem>>, vector<128x384xf32>
    %c1 = arith.constant 1 : index
    %c0_29 = arith.constant 0 : index
    %c0_30 = arith.constant 0 : index
    %48 = vector.load %arg3[%c1, %c0_29, %c0_30] : memref<3x384x128xf32, #tpu.memory_space<vmem>>, vector<1x384x128xf32>
    %49 = vector.shape_cast %48 : vector<1x384x128xf32> to vector<384x128xf32>
    %cst_31 = arith.constant dense<0.000000e+00> : vector<128x128xf32>
    %50 = tpu.matmul %47, %49, %cst_31 {dimension_numbers = #tpu.dot_dimension_numbers<[1], [0], [0], [1], [0, 0, 1, 1], [], []>} : vector<128x384xf32>, vector<384x128xf32>, vector<128x128xf32> -> vector<128x128xf32>
    %51 = arith.addf %46, %50 : vector<128x128xf32>
    %c32 = arith.constant 32 : index
    %c0_32 = arith.constant 0 : index
    %52 = vector.load %arg7[%c32, %c0_32] : memref<160x384xf32, #tpu.memory_space<vmem>>, vector<128x384xf32>
    %c2 = arith.constant 2 : index
    %c0_33 = arith.constant 0 : index
    %c0_34 = arith.constant 0 : index
    %53 = vector.load %arg3[%c2, %c0_33, %c0_34] : memref<3x384x128xf32, #tpu.memory_space<vmem>>, vector<1x384x128xf32>
    %54 = vector.shape_cast %53 : vector<1x384x128xf32> to vector<384x128xf32>
    %cst_35 = arith.constant dense<0.000000e+00> : vector<128x128xf32>
    %55 = tpu.matmul %52, %54, %cst_35 {dimension_numbers = #tpu.dot_dimension_numbers<[1], [0], [0], [1], [0, 0, 1, 1], [], []>} : vector<128x384xf32>, vector<384x128xf32>, vector<128x128xf32> -> vector<128x128xf32>
    %56 = arith.addf %51, %55 : vector<128x128xf32>
    %c0_36 = arith.constant 0 : index
    %c0_37 = arith.constant 0 : index
    %57 = vector.load %arg4[%c0_36, %c0_37] : memref<2x128xf32, #tpu.memory_space<vmem>>, vector<1x128xf32>
    %58 = vector.broadcast %57 : vector<1x128xf32> to vector<128x128xf32>
    %59 = arith.mulf %56, %58 : vector<128x128xf32>
    %c1_38 = arith.constant 1 : index
    %c0_39 = arith.constant 0 : index
    %60 = vector.load %arg4[%c1_38, %c0_39] : memref<2x128xf32, #tpu.memory_space<vmem>>, vector<1x128xf32>
    %61 = vector.broadcast %60 : vector<1x128xf32> to vector<128x128xf32>
    %62 = arith.addf %59, %61 : vector<128x128xf32>
    %cst_40 = arith.constant 0.000000e+00 : f32
    %63 = vector.broadcast %cst_40 : f32 to vector<128x128xf32>
    %64 = arith.maximumf %62, %63 : vector<128x128xf32>
    %65 = vector.shape_cast %64 : vector<128x128xf32> to vector<8x16x128xf32>
    %66 = vector.extract_strided_slice %65 {offsets = [0, 0, 0], sizes = [8, 12, 128], strides = [1, 1, 1]} : vector<8x16x128xf32> to vector<8x12x128xf32>
    %c0_41 = arith.constant 0 : index
    %c0_42 = arith.constant 0 : index
    %c0_43 = arith.constant 0 : index
    %c0_44 = arith.constant 0 : index
    %67 = vector.load %arg5[%c0_41, %c0_42, %c0_43, %c0_44] : memref<1x8x12x128xf32, #tpu.memory_space<vmem>>, vector<1x8x12x128xf32>
    %68 = vector.shape_cast %67 : vector<1x8x12x128xf32> to vector<8x12x128xf32>
    %69 = vector.shape_cast %66 : vector<8x12x128xf32> to vector<1x8x12x128xf32>
    tpu.vector_store %arg5[%c0_41, %c0_42, %c0_43, %c0_44], %69 {strides = array<i32>} : memref<1x8x12x128xf32, #tpu.memory_space<vmem>>, vector<1x8x12x128xf32>,
    return
  }
  func.func @transform_1(%arg0: i32, %arg1: i32) -> (i32, i32, i32) {
    %c0_i32 = arith.constant 0 : i32
    %c0_i32_0 = arith.constant 0 : i32
    %c0_i32_1 = arith.constant 0 : i32
    %c0_i32_2 = arith.constant 0 : i32
    return %c0_i32, %c0_i32_0, %c0_i32_1 : i32, i32, i32
  }
  func.func @transform_2(%arg0: i32, %arg1: i32) -> (i32, i32) {
    %c0_i32 = arith.constant 0 : i32
    %c0_i32_0 = arith.constant 0 : i32
    %c0_i32_1 = arith.constant 0 : i32
    return %c0_i32, %c0_i32_0 : i32, i32
  }
  func.func @transform_3(%arg0: i32, %arg1: i32) -> (i32, i32, i32, i32) {
    %c0_i32 = arith.constant 0 : i32
    %c0_i32_0 = arith.constant 0 : i32
    %c0_i32_1 = arith.constant 0 : i32
    return %arg0, %arg1, %c0_i32, %c0_i32_0 : i32, i32, i32, i32
  }
}

</mosaic_0001>

<llo_original>
// kernel: tpu_custom_call.1
$region0: #{tpu_custom_call.1}
  #allocation0 [shape = 'u32[]', space=smem, size = 0x4, offset = 0x4, fixed_abs, tag = 'smem constant byte address 0x4 - core index']
  #allocation1 [shape = 'u32[144,128]{1,0:T(1,128)}', space=vmem, size = 0x12000, scoped, tag = 'internal scratch']
  #allocation2 [shape = 'f32[336,5]{1,0:T(8,128)}', space=vmem, size = 0x2a000, scoped, tag = 'scratch operand']
  #allocation3 [shape = 'f32[160,384]{1,0:T(8,128)}', space=vmem, size = 0x3c000, scoped, tag = 'scratch operand']
  #allocation4 [shape = 's32[2]{0}', space=sflag, size = 0x8, scoped, tag = 'scratch operand']
  #allocation7 [shape = 's32[]', space=sflag, size = 0x4, offset = 0, fixed_abs, tag = 'sflag constant byte address 0x0 - dummy sync flag']
  #allocation8 [shape = 's32[]', space=sflag, size = 0x4, offset = 0, fixed_abs, tag = 'sflag constant byte address 0x0 - dummy sync flag']
  %s0 = inlined_call_operand.vmem [shape: f32[352,5], index: 0, kind: input, shape index: {}]
  %s1 = inlined_call_operand.hbm [shape: f32[3,384,128], index: 1, kind: input, shape index: {}]
  %s2 = inlined_call_operand.vmem [shape: f32[2,128], index: 2, kind: input, shape index: {}]
  %s3 = inlined_call_operand.vmem [shape: f32[2,8,12,128], index: 3, kind: output, shape index: {}]
  %s4 = sld [smem:[#allocation0]]
  $region121: #{tpu_custom_call.1} parent=0
    _
  %s6 = ssub.s32 1, %s4
  %s7 = scalar_select 0, %s6, %s4
  $region1: #{tpu_custom_call.1} parent=0
    #allocation5 [shape = 'u8[589824]{0}', space=vmem, size = 0x90000, scoped, tag = 'input window, operand 1, single buffered']
    #allocation6 [shape = 's32[2]{0}', space=sflag, size = 0x8, scoped, tag = 'scoped memory for tpu_custom_call.1']
    %8 = vsyncpa [#allocation6], 0
    loop: start=0, step=1, limit=4
    $region2: #{tpu_custom_call.1} parent=1 // loop_pre_header
      _
    $region3: #{tpu_custom_call.1} parent=1 // loop_header
      %s10 = sphi 0, %s14
      %p11 = scmp.ge.s32.totalorder %s10, 4
      %s17 = sphi 0, %s29
      %s18 = sphi 0, %s25
      %s19 = sphi 0, %s17
      %s20 = sphi 0, %s18
      %s21 = sphi 0, %s19
      %s22 = sphi 0, %s20
      %s30 = sphi 0, %s30
      %s32 = sphi 0, %s30
      %s33 = sphi 0, %s32
      %s47 = sphi 0, %s33
      %s51 = sphi 0, %s51
      %s53 = sphi 0, %s51
      %s54 = sphi 0, %s53
      %s68 = sphi 0, %s54
      %s76 = sphi 0, %s78
      %s79 = sphi 0, %s76
      %s80 = sphi 0, %s79
      %s96 = sphi 0, %s80
    $region4: #{tpu_custom_call.1} parent=1 // loop_header_branch
      %13 = sbr.rel (%p11) target = $region8
    $region5: #{tpu_custom_call.1} parent=1 // loop_body
      %s15 = ssub.s32 %s10, 1
      %s16 = ssub.s32 %s10, 2
      %s23 = sadd.s32 1, %s18
      %p24 = scmp.ge.s32.totalorder %s23, 1
      %s25 = scalar_select %p24, 0, %s23
      %s26 = sadd.s32 1, %s17
      %s27 = scalar_select %p24, %s26, %s17
      %p28 = scmp.ge.s32.totalorder %s27, 2
      %s29 = scalar_select %p28, 0, %s27
      %s31 = sadd.s32 %s30, 1
      %p34 = scmp.eq.s32.totalorder %s10, 1
      %p35 = scmp.ne.s32.totalorder %s30, %s32
      %p36 = scmp.eq.s32.totalorder %s10, 0
      %p37 = por %p35, %p36
      %p38 = scmp.ne.s32.totalorder %s30, %s32
      %p39 = scmp.eq.s32.totalorder %s15, 1
      %p40 = por %p38, %p39
      %p41 = scmp.ne.s32.totalorder %s32, %s33
      %p42 = scmp.eq.s32.totalorder %s15, 0
      %p43 = por %p41, %p42
      %p44 = scmp.ne.s32.totalorder %s32, %s33
      %p45 = scmp.eq.s32.totalorder %s16, 1
      %p46 = por %p44, %p45
      %p48 = scmp.ne.s32.totalorder %s33, %s47
      %p49 = scmp.eq.s32.totalorder %s16, 0
      %p50 = por %p48, %p49
      %s52 = sadd.s32 %s51, 1
      %p55 = scmp.eq.s32.totalorder %s10, 1
      %p56 = scmp.ne.s32.totalorder %s51, %s53
      %p57 = scmp.eq.s32.totalorder %s10, 0
      %p58 = por %p56, %p57
      %p59 = scmp.ne.s32.totalorder %s51, %s53
      %p60 = scmp.eq.s32.totalorder %s15, 1
      %p61 = por %p59, %p60
      %p62 = scmp.ne.s32.totalorder %s53, %s54
      %p63 = scmp.eq.s32.totalorder %s15, 0
      %p64 = por %p62, %p63
      %p65 = scmp.ne.s32.totalorder %s53, %s54
      %p66 = scmp.eq.s32.totalorder %s16, 1
      %p67 = por %p65, %p66
      %p69 = scmp.ne.s32.totalorder %s54, %s68
      %p70 = scmp.eq.s32.totalorder %s16, 0
      %p71 = por %p69, %p70
      %s72 = ssub.s32 %s17, %s29
      %s73 = ssub.s32 %s18, %s25
      %s74 = sor.u32 %s72, %s73
      %p75 = scmp.eq.s32.totalorder %s74, 0
      %s77 = sadd.s32 %s76, 1
      %s78 = scalar_select %p75, %s76, %s77
      %p81 = pneg %p75
      %p82 = scmp.eq.s32.totalorder %s10, 1
      %p83 = por %p81, %p82
      %p84 = scmp.ne.s32.totalorder %s76, %s79
      %p85 = scmp.eq.s32.totalorder %s10, 0
      %p86 = por %p84, %p85
      %p87 = scmp.ne.s32.totalorder %s76, %s79
      %p88 = scmp.eq.s32.totalorder %s15, 1
      %p89 = por %p87, %p88
      %p90 = scmp.ne.s32.totalorder %s79, %s80
      %p91 = scmp.eq.s32.totalorder %s15, 0
      %p92 = por %p90, %p91
      %p93 = scmp.ne.s32.totalorder %s79, %s80
      %p94 = scmp.eq.s32.totalorder %s16, 1
      %p95 = por %p93, %p94
      %p97 = scmp.ne.s32.totalorder %s80, %s96
      %p98 = scmp.eq.s32.totalorder %s16, 0
      %p99 = por %p97, %p98
      %p100 = scmp.le.s32.totalorder 1, %s10
      %p101 = scmp.lt.s32.totalorder %s10, 3
      %p102 = pnand %p100, %p101
      %p103 = pneg %p102
      // Predicated region
      $region9: #{tpu_custom_call.1} parent=5 // pred_check
        _
      $region10: #{tpu_custom_call.1} parent=5 // pred_check_branch
        %105 = sbr.rel (%p102) target = $region12
      $region11: #{tpu_custom_call.1} parent=5 // pred_region
        %s106 = ssub.s32 %s10, 1
        // Predicated region
        $region13: #{tpu_custom_call.1} parent=11 // pred_check
          %p107 = pneg %p43
        $region14: #{tpu_custom_call.1} parent=11 // pred_check_branch
          %109 = sbr.rel (%p107) target = $region16
        $region15: #{tpu_custom_call.1} parent=11 // pred_region
          %s111 = ssub.s32 18432, 18432
          %112 = vsyncadd [#allocation6], %s111
          %s113 = sshll.u32 [#allocation5], 4
          %s114 = int_to_ptr.vmem [resolvable:$true] %s113
          %119 = dma.hbm_to_vmem [thread:$0]  %s1, 18432, %s114, [#allocation6], 128, 128, 8
        $region16: #{tpu_custom_call.1} parent=11 // pred_fallthru
          _
        // Predicated region
        $region17: #{tpu_custom_call.1} parent=11 // pred_check
          %p120 = pneg %p64
        $region18: #{tpu_custom_call.1} parent=11 // pred_check_branch
          %122 = sbr.rel (%p120) target = $region20
        $region19: #{tpu_custom_call.1} parent=11 // pred_region
          _
        $region20: #{tpu_custom_call.1} parent=11 // pred_fallthru
          _
      $region12: #{tpu_custom_call.1} parent=5 // pred_fallthru
        _
      %p123 = scmp.lt.s32.totalorder %s10, 2
      // Predicated region
      $region21: #{tpu_custom_call.1} parent=5 // pred_check
        %p124 = pneg %p123
      $region22: #{tpu_custom_call.1} parent=5 // pred_check_branch
        %126 = sbr.rel (%p124) target = $region24
      $region23: #{tpu_custom_call.1} parent=5 // pred_region
        _
      $region24: #{tpu_custom_call.1} parent=5 // pred_fallthru
        _
      %p127 = scmp.le.s32.totalorder 1, %s10
      %p128 = scmp.lt.s32.totalorder %s10, 3
      %p129 = pnand %p127, %p128
      %p130 = pneg %p129
      // Predicated region
      $region25: #{tpu_custom_call.1} parent=5 // pred_check
        _
      $region26: #{tpu_custom_call.1} parent=5 // pred_check_branch
        %132 = sbr.rel (%p129) target = $region28
      $region27: #{tpu_custom_call.1} parent=5 // pred_region
        %s133 = ssub.s32 %s10, 1
        // Predicated region
        $region29: #{tpu_custom_call.1} parent=27 // pred_check
          %p134 = pneg %p43
        $region30: #{tpu_custom_call.1} parent=27 // pred_check_branch
          %136 = sbr.rel (%p134) target = $region32
        $region31: #{tpu_custom_call.1} parent=27 // pred_region
          %137 = dma.done [#allocation6], 18432
        $region32: #{tpu_custom_call.1} parent=27 // pred_fallthru
          _
        %p138 = pneg %p43
        %p139 = pneg %p40
        %p140 = pneg %p64
        %p141 = pneg %p61
        %p142 = pneg %p92
        %p143 = pneg %p89
        %s144 = smul.u32 8, %s20
        %p145 = scmp.lt.s32.totalorder %s19, 1
        %s146 = scalar_select %p145, %s19, 1
        %p147 = scmp.lt.s32.totalorder %s144, 7
        %s148 = scalar_select %p147, %s144, 7
        %s149 = smul.addr %s148, 2
        %s150 = smul.addr %s146, 16
        %s151 = sadd.s32 %s149, %s150
        %s152 = smul.addr %s151, 8
        %s153 = scalar_lea.vmem %s3, %s152
        %s154 = smul.u32 8, %s20
        %p155 = scmp.lt.s32.totalorder %s19, 1
        %s156 = scalar_select %p155, %s19, 1
        %p157 = scmp.lt.s32.totalorder %s154, 7
        %s158 = scalar_select %p157, %s154, 7
        %s159 = smul.addr %s158, 2
        %s160 = smul.addr %s156, 16
        %s161 = sadd.s32 %s159, %s160
        %s162 = smul.addr %s161, 8
        %s163 = scalar_lea.vmem %s3, %s162
        %s164 = smul.u32 8, %s20
        %p165 = scmp.lt.s32.totalorder %s20, 0
        %s166 = ssub.s32 0, %s20
        %s167 = scalar_select %p165, %s166, %s20
        %s168 = sand.u32 %s167, 1
        %s169 = ssub.s32 0, %s168
        %s170 = scalar_select %p165, %s169, %s168
        %p171 = scmp.ne.s32.totalorder %s170, 0
        %p172 = scmp.lt.s32.totalorder %s170, 0
        %p173 = pnand %p172, %p171
        %p174 = pneg %p173
        %s175 = sadd.s32 %s170, 2
        %s176 = scalar_select %p174, %s175, %s170
        %p177 = scmp.eq.s32.totalorder %s20, 0
        // Predicated region
        $region33: #{tpu_custom_call.1} parent=27 // pred_check
          %p178 = pneg %p177
        $region34: #{tpu_custom_call.1} parent=27 // pred_check_branch
          %180 = sbr.rel (%p178) target = $region36
        $region35: #{tpu_custom_call.1} parent=27 // pred_region
          %s181 = smul.u32 %s19, 176
          %s182 = smul.u32 %s176, 168
          %s183 = scalar_lea.vmem %s0, %s181
          %s184 = scalar_lea.vmem [#allocation2], %s182
          %s185 = scalar_lea.sflag [#allocation4], %s176
          %p187 = scmp.lt.u32.totalorder 168, 8
          %p188 = pneg %p187
          // Predicated region
          $region37: #{tpu_custom_call.1} parent=35 // pred_check
            _
          $region38: #{tpu_custom_call.1} parent=35 // pred_check_branch
            %190 = sbr.rel (%p187) target = $region40
          $region39: #{tpu_custom_call.1} parent=35 // pred_region
            %s206 = sand.u32 168, 7
            %p207 = scmp.eq.s32.totalorder %s206, 0
            // Predicated region
            $region52: #{tpu_custom_call.1} parent=39 // pred_check
              %p208 = pneg %p207
            $region53: #{tpu_custom_call.1} parent=39 // pred_check_branch
              %210 = sbr.rel (%p208) target = $region55
            $region54: #{tpu_custom_call.1} parent=39 // pred_region
              loop: start=0, step=1, limit=1
              $region56: #{tpu_custom_call.1} parent=54 // loop_pre_header
                _
              $region57: #{tpu_custom_call.1} parent=54 // loop_header
                %s212 = sphi 0, %s216
                %p213 = scmp.ge.s32.totalorder %s212, 1
                %s217 = sphi %s183, %s183
                %s218 = sphi %s184, %s184
              $region58: #{tpu_custom_call.1} parent=54 // loop_header_branch
                %215 = sbr.rel (%p213) target = $region62
              $region59: #{tpu_custom_call.1} parent=54 // loop_body
                %v219 = vld [vmem:[%s217] sm:$0xff]
                %220 = vst [vmem:[%s218] sm:$0xff] %v219
                %v221 = vld [vmem:[%s217 + $0x8] sm:$0xff]
                %222 = vst [vmem:[%s218 + $0x8] sm:$0xff] %v221
                %v223 = vld [vmem:[%s217 + $0x10] sm:$0xff]
                %224 = vst [vmem:[%s218 + $0x10] sm:$0xff] %v223
                %v225 = vld [vmem:[%s217 + $0x18] sm:$0xff]
                %226 = vst [vmem:[%s218 + $0x18] sm:$0xff] %v225
                %v227 = vld [vmem:[%s217 + $0x20] sm:$0xff]
                %228 = vst [vmem:[%s218 + $0x20] sm:$0xff] %v227
                %v229 = vld [vmem:[%s217 + $0x28] sm:$0xff]
                %230 = vst [vmem:[%s218 + $0x28] sm:$0xff] %v229
                %v231 = vld [vmem:[%s217 + $0x30] sm:$0xff]
                %232 = vst [vmem:[%s218 + $0x30] sm:$0xff] %v231
                %v233 = vld [vmem:[%s217 + $0x38] sm:$0xff]
                %234 = vst [vmem:[%s218 + $0x38] sm:$0xff] %v233
                %v235 = vld [vmem:[%s217 + $0x40] sm:$0xff]
                %236 = vst [vmem:[%s218 + $0x40] sm:$0xff] %v235
                %v237 = vld [vmem:[%s217 + $0x48] sm:$0xff]
                %238 = vst [vmem:[%s218 + $0x48] sm:$0xff] %v237
                %v239 = vld [vmem:[%s217 + $0x50] sm:$0xff]
                %240 = vst [vmem:[%s218 + $0x50] sm:$0xff] %v239
                %v241 = vld [vmem:[%s217 + $0x58] sm:$0xff]
                %242 = vst [vmem:[%s218 + $0x58] sm:$0xff] %v241
                %v243 = vld [vmem:[%s217 + $0x60] sm:$0xff]
                %244 = vst [vmem:[%s218 + $0x60] sm:$0xff] %v243
                %v245 = vld [vmem:[%s217 + $0x68] sm:$0xff]
                %246 = vst [vmem:[%s218 + $0x68] sm:$0xff] %v245
                %v247 = vld [vmem:[%s217 + $0x70] sm:$0xff]
                %248 = vst [vmem:[%s218 + $0x70] sm:$0xff] %v247
                %v249 = vld [vmem:[%s217 + $0x78] sm:$0xff]
                %250 = vst [vmem:[%s218 + $0x78] sm:$0xff] %v249
                %v251 = vld [vmem:[%s217 + $0x80] sm:$0xff]
                %252 = vst [vmem:[%s218 + $0x80] sm:$0xff] %v251
                %v253 = vld [vmem:[%s217 + $0x88] sm:$0xff]
                %254 = vst [vmem:[%s218 + $0x88] sm:$0xff] %v253
                %v255 = vld [vmem:[%s217 + $0x90] sm:$0xff]
                %256 = vst [vmem:[%s218 + $0x90] sm:$0xff] %v255
                %v257 = vld [vmem:[%s217 + $0x98] sm:$0xff]
                %258 = vst [vmem:[%s218 + $0x98] sm:$0xff] %v257
                %v259 = vld [vmem:[%s217 + $0xa0] sm:$0xff]
                %260 = vst [vmem:[%s218 + $0xa0] sm:$0xff] %v259
              $region60: #{tpu_custom_call.1} parent=54 // loop_footer
                %s216 = sadd.s32 1, %s212
              $region61: #{tpu_custom_call.1} parent=54 // loop_footer_branch
                %211 = sbr.rel target = $region57
              $region62: #{tpu_custom_call.1} parent=54 // loop_exit
                _
            $region55: #{tpu_custom_call.1} parent=39 // pred_fallthru
              _
            %p261 = pneg %p207
            // Predicated region
            $region63: #{tpu_custom_call.1} parent=39 // pred_check
              _
            $region64: #{tpu_custom_call.1} parent=39 // pred_check_branch
              %263 = sbr.rel (%p207) target = $region66
            $region65: #{tpu_custom_call.1} parent=39 // pred_region
              %s264 = sand.u32 168, 7
            $region66: #{tpu_custom_call.1} parent=39 // pred_fallthru
              _
          $region40: #{tpu_custom_call.1} parent=35 // pred_fallthru
            _
          // Predicated region
          $region41: #{tpu_custom_call.1} parent=35 // pred_check
            %p191 = pneg %p187
          $region42: #{tpu_custom_call.1} parent=35 // pred_check_branch
            %193 = sbr.rel (%p191) target = $region44
          $region43: #{tpu_custom_call.1} parent=35 // pred_region
            %s194 = sshll.u32 1, 168
            %s195 = ssub.s32 %s194, 1
            loop: start=0, step=1, limit=1
            $region45: #{tpu_custom_call.1} parent=43 // loop_pre_header
              _
            $region46: #{tpu_custom_call.1} parent=43 // loop_header
              %s197 = sphi 0, %s201
              %p198 = scmp.ge.s32.totalorder %s197, 1
              %s202 = sphi %s183, %s183
              %s203 = sphi %s184, %s184
            $region47: #{tpu_custom_call.1} parent=43 // loop_header_branch
              %200 = sbr.rel (%p198) target = $region51
            $region48: #{tpu_custom_call.1} parent=43 // loop_body
              %v204 = vld [vmem:[%s202] sm:%s195]
              %205 = vst [vmem:[%s203] sm:%s195] %v204
            $region49: #{tpu_custom_call.1} parent=43 // loop_footer
              %s201 = sadd.s32 1, %s197
            $region50: #{tpu_custom_call.1} parent=43 // loop_footer_branch
              %196 = sbr.rel target = $region46
            $region51: #{tpu_custom_call.1} parent=43 // loop_exit
              _
          $region44: #{tpu_custom_call.1} parent=35 // pred_fallthru
            _
          // Predicated region
          $region67: #{tpu_custom_call.1} parent=35 // pred_check
            _
          $region68: #{tpu_custom_call.1} parent=35 // pred_check_branch
            %267 = sbr.rel (0) target = $region70
          $region69: #{tpu_custom_call.1} parent=35 // pred_region
            %268 = vsyncadd %s185, 2688
          $region70: #{tpu_custom_call.1} parent=35 // pred_fallthru
            _
        $region36: #{tpu_custom_call.1} parent=27 // pred_fallthru
          _
        %s269 = smul.u32 %s19, 176
        %s270 = smul.u32 %s20, 128
        %s271 = sadd.s32 %s269, %s270
        %s272 = smul.u32 %s176, 168
        %s273 = scalar_lea.sflag [#allocation4], %s176
        %s274 = smul.u32 168, 1
        %s275 = sshll.u32 %s274, 4
        %276 = dma.done %s273, %s275
        %s277 = sadd.s32 %s20, 1
        %p278 = scmp.lt.s32.totalorder %s277, 1
        // Predicated region
        $region71: #{tpu_custom_call.1} parent=27 // pred_check
          %p279 = pneg %p278
        $region72: #{tpu_custom_call.1} parent=27 // pred_check_branch
          %281 = sbr.rel (%p279) target = $region74
        $region73: #{tpu_custom_call.1} parent=27 // pred_region
          %s282 = ssub.s32 1, %s176
          %s283 = smul.u32 %s277, 128
          %s284 = sadd.s32 %s269, %s283
          %s285 = smul.u32 %s282, 168
          %s286 = scalar_lea.vmem %s0, %s284
          %s287 = scalar_lea.vmem [#allocation2], %s285
          %s288 = scalar_lea.sflag [#allocation4], %s282
          %p290 = scmp.lt.u32.totalorder 168, 8
          %p291 = pneg %p290
          // Predicated region
          $region75: #{tpu_custom_call.1} parent=73 // pred_check
            _
          $region76: #{tpu_custom_call.1} parent=73 // pred_check_branch
            %293 = sbr.rel (%p290) target = $region78
          $region77: #{tpu_custom_call.1} parent=73 // pred_region
            %s309 = sand.u32 168, 7
            %p310 = scmp.eq.s32.totalorder %s309, 0
            // Predicated region
            $region90: #{tpu_custom_call.1} parent=77 // pred_check
              %p311 = pneg %p310
            $region91: #{tpu_custom_call.1} parent=77 // pred_check_branch
              %313 = sbr.rel (%p311) target = $region93
            $region92: #{tpu_custom_call.1} parent=77 // pred_region
              loop: start=0, step=1, limit=1
              $region94: #{tpu_custom_call.1} parent=92 // loop_pre_header
                _
              $region95: #{tpu_custom_call.1} parent=92 // loop_header
                %s315 = sphi 0, %s319
                %p316 = scmp.ge.s32.totalorder %s315, 1
                %s320 = sphi %s286, %s286
                %s321 = sphi %s287, %s287
              $region96: #{tpu_custom_call.1} parent=92 // loop_header_branch
                %318 = sbr.rel (%p316) target = $region100
              $region97: #{tpu_custom_call.1} parent=92 // loop_body
                %v322 = vld [vmem:[%s320] sm:$0xff]
                %323 = vst [vmem:[%s321] sm:$0xff] %v322
                %v324 = vld [vmem:[%s320 + $0x8] sm:$0xff]
                %325 = vst [vmem:[%s321 + $0x8] sm:$0xff] %v324
                %v326 = vld [vmem:[%s320 + $0x10] sm:$0xff]
                %327 = vst [vmem:[%s321 + $0x10] sm:$0xff] %v326
                %v328 = vld [vmem:[%s320 + $0x18] sm:$0xff]
                %329 = vst [vmem:[%s321 + $0x18] sm:$0xff] %v328
                %v330 = vld [vmem:[%s320 + $0x20] sm:$0xff]
                %331 = vst [vmem:[%s321 + $0x20] sm:$0xff] %v330
                %v332 = vld [vmem:[%s320 + $0x28] sm:$0xff]
                %333 = vst [vmem:[%s321 + $0x28] sm:$0xff] %v332
                %v334 = vld [vmem:[%s320 + $0x30] sm:$0xff]
                %335 = vst [vmem:[%s321 + $0x30] sm:$0xff] %v334
                %v336 = vld [vmem:[%s320 + $0x38] sm:$0xff]
                %337 = vst [vmem:[%s321 + $0x38] sm:$0xff] %v336
                %v338 = vld [vmem:[%s320 + $0x40] sm:$0xff]
                %339 = vst [vmem:[%s321 + $0x40] sm:$0xff] %v338
                %v340 = vld [vmem:[%s320 + $0x48] sm:$0xff]
                %341 = vst [vmem:[%s321 + $0x48] sm:$0xff] %v340
                %v342 = vld [vmem:[%s320 + $0x50] sm:$0xff]
                %343 = vst [vmem:[%s321 + $0x50] sm:$0xff] %v342
                %v344 = vld [vmem:[%s320 + $0x58] sm:$0xff]
                %345 = vst [vmem:[%s321 + $0x58] sm:$0xff] %v344
                %v346 = vld [vmem:[%s320 + $0x60] sm:$0xff]
                %347 = vst [vmem:[%s321 + $0x60] sm:$0xff] %v346
                %v348 = vld [vmem:[%s320 + $0x68] sm:$0xff]
                %349 = vst [vmem:[%s321 + $0x68] sm:$0xff] %v348
                %v350 = vld [vmem:[%s320 + $0x70] sm:$0xff]
                %351 = vst [vmem:[%s321 + $0x70] sm:$0xff] %v350
                %v352 = vld [vmem:[%s320 + $0x78] sm:$0xff]
                %353 = vst [vmem:[%s321 + $0x78] sm:$0xff] %v352
                %v354 = vld [vmem:[%s320 + $0x80] sm:$0xff]
                %355 = vst [vmem:[%s321 + $0x80] sm:$0xff] %v354
                %v356 = vld [vmem:[%s320 + $0x88] sm:$0xff]
                %357 = vst [vmem:[%s321 + $0x88] sm:$0xff] %v356
                %v358 = vld [vmem:[%s320 + $0x90] sm:$0xff]
                %359 = vst [vmem:[%s321 + $0x90] sm:$0xff] %v358
                %v360 = vld [vmem:[%s320 + $0x98] sm:$0xff]
                %361 = vst [vmem:[%s321 + $0x98] sm:$0xff] %v360
                %v362 = vld [vmem:[%s320 + $0xa0] sm:$0xff]
                %363 = vst [vmem:[%s321 + $0xa0] sm:$0xff] %v362
              $region98: #{tpu_custom_call.1} parent=92 // loop_footer
                %s319 = sadd.s32 1, %s315
              $region99: #{tpu_custom_call.1} parent=92 // loop_footer_branch
                %314 = sbr.rel target = $region95
              $region100: #{tpu_custom_call.1} parent=92 // loop_exit
                _
            $region93: #{tpu_custom_call.1} parent=77 // pred_fallthru
              _
            %p364 = pneg %p310
            // Predicated region
            $region101: #{tpu_custom_call.1} parent=77 // pred_check
              _
            $region102: #{tpu_custom_call.1} parent=77 // pred_check_branch
              %366 = sbr.rel (%p310) target = $region104
            $region103: #{tpu_custom_call.1} parent=77 // pred_region
              %s367 = sand.u32 168, 7
            $region104: #{tpu_custom_call.1} parent=77 // pred_fallthru
              _
          $region78: #{tpu_custom_call.1} parent=73 // pred_fallthru
            _
          // Predicated region
          $region79: #{tpu_custom_call.1} parent=73 // pred_check
            %p294 = pneg %p290
          $region80: #{tpu_custom_call.1} parent=73 // pred_check_branch
            %296 = sbr.rel (%p294) target = $region82
          $region81: #{tpu_custom_call.1} parent=73 // pred_region
            %s297 = sshll.u32 1, 168
            %s298 = ssub.s32 %s297, 1
            loop: start=0, step=1, limit=1
            $region83: #{tpu_custom_call.1} parent=81 // loop_pre_header
              _
            $region84: #{tpu_custom_call.1} parent=81 // loop_header
              %s300 = sphi 0, %s304
              %p301 = scmp.ge.s32.totalorder %s300, 1
              %s305 = sphi %s286, %s286
              %s306 = sphi %s287, %s287
            $region85: #{tpu_custom_call.1} parent=81 // loop_header_branch
              %303 = sbr.rel (%p301) target = $region89
            $region86: #{tpu_custom_call.1} parent=81 // loop_body
              %v307 = vld [vmem:[%s305] sm:%s298]
              %308 = vst [vmem:[%s306] sm:%s298] %v307
            $region87: #{tpu_custom_call.1} parent=81 // loop_footer
              %s304 = sadd.s32 1, %s300
            $region88: #{tpu_custom_call.1} parent=81 // loop_footer_branch
              %299 = sbr.rel target = $region84
            $region89: #{tpu_custom_call.1} parent=81 // loop_exit
              _
          $region82: #{tpu_custom_call.1} parent=73 // pred_fallthru
            _
          // Predicated region
          $region105: #{tpu_custom_call.1} parent=73 // pred_check
            _
          $region106: #{tpu_custom_call.1} parent=73 // pred_check_branch
            %370 = sbr.rel (0) target = $region108
          $region107: #{tpu_custom_call.1} parent=73 // pred_region
            %371 = vsyncadd %s288, 2688
          $region108: #{tpu_custom_call.1} parent=73 // pred_fallthru
            _
        $region74: #{tpu_custom_call.1} parent=27 // pred_fallthru
          _
        %372 = vst [vmem:[#allocation3] sm:$0xff] 0.0
        %373 = vst [vmem:[#allocation3 + $0x8] sm:$0xff] 0.0
        %374 = vst [vmem:[#allocation3 + $0x10] sm:$0xff] 0.0
        %375 = vst [vmem:[#allocation3 + $0x18] sm:$0xff] 0.0
        %376 = vst [vmem:[#allocation3 + $0x20] sm:$0xff] 0.0
        %377 = vst [vmem:[#allocation3 + $0x28] sm:$0xff] 0.0
        %378 = vst [vmem:[#allocation3 + $0x30] sm:$0xff] 0.0
        %379 = vst [vmem:[#allocation3 + $0x38] sm:$0xff] 0.0
        %380 = vst [vmem:[#allocation3 + $0x40] sm:$0xff] 0.0
        %381 = vst [vmem:[#allocation3 + $0x48] sm:$0xff] 0.0
        %382 = vst [vmem:[#allocation3 + $0x50] sm:$0xff] 0.0
        %383 = vst [vmem:[#allocation3 + $0x58] sm:$0xff] 0.0
        %384 = vst [vmem:[#allocation3 + $0x60] sm:$0xff] 0.0
        %385 = vst [vmem:[#allocation3 + $0x68] sm:$0xff] 0.0
        %386 = vst [vmem:[#allocation3 + $0x70] sm:$0xff] 0.0
        %387 = vst [vmem:[#allocation3 + $0x78] sm:$0xff] 0.0
        %388 = vst [vmem:[#allocation3 + $0x80] sm:$0xff] 0.0
        %389 = vst [vmem:[#allocation3 + $0x88] sm:$0xff] 0.0
        %390 = vst [vmem:[#allocation3 + $0x90] sm:$0xff] 0.0
        %391 = vst [vmem:[#allocation3 + $0x98] sm:$0xff] 0.0
        %392 = vst [vmem:[#allocation3 + $0xa0] sm:$0xff] 0.0
        %393 = vst [vmem:[#allocation3 + $0xa8] sm:$0xff] 0.0
        %394 = vst [vmem:[#allocation3 + $0xb0] sm:$0xff] 0.0
        %395 = vst [vmem:[#allocation3 + $0xb8] sm:$0xff] 0.0
        %396 = vst [vmem:[#allocation3 + $0xc0] sm:$0xff] 0.0
        %397 = vst [vmem:[#allocation3 + $0xc8] sm:$0xff] 0.0
        %398 = vst [vmem:[#allocation3 + $0xd0] sm:$0xff] 0.0
        %399 = vst [vmem:[#allocation3 + $0xd8] sm:$0xff] 0.0
        %400 = vst [vmem:[#allocation3 + $0xe0] sm:$0xff] 0.0
        %401 = vst [vmem:[#allocation3 + $0xe8] sm:$0xff] 0.0
        %402 = vst [vmem:[#allocation3 + $0xf0] sm:$0xff] 0.0
        %403 = vst [vmem:[#allocation3 + $0xf8] sm:$0xff] 0.0
        %404 = vst [vmem:[#allocation3 + $0x100] sm:$0xff] 0.0
        %405 = vst [vmem:[#allocation3 + $0x108] sm:$0xff] 0.0
        %406 = vst [vmem:[#allocation3 + $0x110] sm:$0xff] 0.0
        %407 = vst [vmem:[#allocation3 + $0x118] sm:$0xff] 0.0
        %408 = vst [vmem:[#allocation3 + $0x120] sm:$0xff] 0.0
        %409 = vst [vmem:[#allocation3 + $0x128] sm:$0xff] 0.0
        %410 = vst [vmem:[#allocation3 + $0x130] sm:$0xff] 0.0
        %411 = vst [vmem:[#allocation3 + $0x138] sm:$0xff] 0.0
        %412 = vst [vmem:[#allocation3 + $0x140] sm:$0xff] 0.0
        %413 = vst [vmem:[#allocation3 + $0x148] sm:$0xff] 0.0
        %414 = vst [vmem:[#allocation3 + $0x150] sm:$0xff] 0.0
        %415 = vst [vmem:[#allocation3 + $0x158] sm:$0xff] 0.0
        %416 = vst [vmem:[#allocation3 + $0x160] sm:$0xff] 0.0
        %417 = vst [vmem:[#allocation3 + $0x168] sm:$0xff] 0.0
        %418 = vst [vmem:[#allocation3 + $0x170] sm:$0xff] 0.0
        %419 = vst [vmem:[#allocation3 + $0x178] sm:$0xff] 0.0
        %420 = vst [vmem:[#allocation3 + $0x180] sm:$0xff] 0.0
        %421 = vst [vmem:[#allocation3 + $0x188] sm:$0xff] 0.0
        %422 = vst [vmem:[#allocation3 + $0x190] sm:$0xff] 0.0
        %423 = vst [vmem:[#allocation3 + $0x198] sm:$0xff] 0.0
        %424 = vst [vmem:[#allocation3 + $0x1a0] sm:$0xff] 0.0
        %425 = vst [vmem:[#allocation3 + $0x1a8] sm:$0xff] 0.0
        %426 = vst [vmem:[#allocation3 + $0x1b0] sm:$0xff] 0.0
        %427 = vst [vmem:[#allocation3 + $0x1b8] sm:$0xff] 0.0
        %428 = vst [vmem:[#allocation3 + $0x1c0] sm:$0xff] 0.0
        %429 = vst [vmem:[#allocation3 + $0x1c8] sm:$0xff] 0.0
        %430 = vst [vmem:[#allocation3 + $0x1d0] sm:$0xff] 0.0
        %431 = vst [vmem:[#allocation3 + $0x1d8] sm:$0xff] 0.0
        %s432 = scalar_lea.vmem [#allocation2], %s272
        %v433 = vld [vmem:[%s432] sm:$0xff]
        %v434 = vld [vmem:[%s432 + $0x8] sm:$0xff]
        %v435 = vld [vmem:[%s432 + $0x10] sm:$0xff]
        %v436 = vld [vmem:[%s432 + $0x18] sm:$0xff]
        %v437 = vld [vmem:[%s432 + $0x20] sm:$0xff]
        %v438 = vld [vmem:[%s432 + $0x28] sm:$0xff]
        %v439 = vld [vmem:[%s432 + $0x30] sm:$0xff]
        %v440 = vld [vmem:[%s432 + $0x38] sm:$0xff]
        %v441 = vld [vmem:[%s432 + $0x40] sm:$0xff]
        %v442 = vld [vmem:[%s432 + $0x48] sm:$0xff]
        %v443 = vld [vmem:[%s432 + $0x50] sm:$0xff]
        %v444 = vld [vmem:[%s432 + $0x58] sm:$0xff]
        %v445 = vld [vmem:[%s432 + $0x60] sm:$0xff]
        %v446 = vld [vmem:[%s432 + $0x68] sm:$0xff]
        %v447 = vld [vmem:[%s432 + $0x70] sm:$0xff]
        %v448 = vld [vmem:[%s432 + $0x78] sm:$0xff]
        %v449 = vld [vmem:[%s432 + $0x80] sm:$0xff]
        %v450 = vld [vmem:[%s432 + $0x88] sm:$0xff]
        %v451 = vld [vmem:[%s432 + $0x90] sm:$0xff]
        %v452 = vld [vmem:[%s432 + $0x98] sm:$0xff]
        %vm453 = vcmask 39936
        %454 = vst.msk [vmem:[#allocation3] sm:$0xff] %vm453, %v433
        %455 = vst.msk [vmem:[#allocation3 + $0x18] sm:$0xff] %vm453, %v434
        %456 = vst.msk [vmem:[#allocation3 + $0x30] sm:$0xff] %vm453, %v435
        %457 = vst.msk [vmem:[#allocation3 + $0x48] sm:$0xff] %vm453, %v436
        %458 = vst.msk [vmem:[#allocation3 + $0x60] sm:$0xff] %vm453, %v437
        %459 = vst.msk [vmem:[#allocation3 + $0x78] sm:$0xff] %vm453, %v438
        %460 = vst.msk [vmem:[#allocation3 + $0x90] sm:$0xff] %vm453, %v439
        %461 = vst.msk [vmem:[#allocation3 + $0xa8] sm:$0xff] %vm453, %v440
        %462 = vst.msk [vmem:[#allocation3 + $0xc0] sm:$0xff] %vm453, %v441
        %463 = vst.msk [vmem:[#allocation3 + $0xd8] sm:$0xff] %vm453, %v442
        %464 = vst.msk [vmem:[#allocation3 + $0xf0] sm:$0xff] %vm453, %v443
        %465 = vst.msk [vmem:[#allocation3 + $0x108] sm:$0xff] %vm453, %v444
        %466 = vst.msk [vmem:[#allocation3 + $0x120] sm:$0xff] %vm453, %v445
        %467 = vst.msk [vmem:[#allocation3 + $0x138] sm:$0xff] %vm453, %v446
        %468 = vst.msk [vmem:[#allocation3 + $0x150] sm:$0xff] %vm453, %v447
        %469 = vst.msk [vmem:[#allocation3 + $0x168] sm:$0xff] %vm453, %v448
        %470 = vst.msk [vmem:[#allocation3 + $0x180] sm:$0xff] %vm453, %v449
        %471 = vst.msk [vmem:[#allocation3 + $0x198] sm:$0xff] %vm453, %v450
        %472 = vst.msk [vmem:[#allocation3 + $0x1b0] sm:$0xff] %vm453, %v451
        %473 = vst.msk [vmem:[#allocation3 + $0x1c8] sm:$0xff] %vm453, %v452
        %s474 = sadd.s32 %s272, 1
        %s475 = scalar_lea.vmem [#allocation2], %s474
        %v476 = vld [vmem:[%s475] sm:$0xff]
        %v477 = vld [vmem:[%s475 + $0x8] sm:$0xff]
        %v478 = vld [vmem:[%s475 + $0x10] sm:$0xff]
        %v479 = vld [vmem:[%s475 + $0x18] sm:$0xff]
        %v480 = vld [vmem:[%s475 + $0x20] sm:$0xff]
        %v481 = vld [vmem:[%s475 + $0x28] sm:$0xff]
        %v482 = vld [vmem:[%s475 + $0x30] sm:$0xff]
        %v483 = vld [vmem:[%s475 + $0x38] sm:$0xff]
        %v484 = vld [vmem:[%s475 + $0x40] sm:$0xff]
        %v485 = vld [vmem:[%s475 + $0x48] sm:$0xff]
        %v486 = vld [vmem:[%s475 + $0x50] sm:$0xff]
        %v487 = vld [vmem:[%s475 + $0x58] sm:$0xff]
        %v488 = vld [vmem:[%s475 + $0x60] sm:$0xff]
        %v489 = vld [vmem:[%s475 + $0x68] sm:$0xff]
        %v490 = vld [vmem:[%s475 + $0x70] sm:$0xff]
        %v491 = vld [vmem:[%s475 + $0x78] sm:$0xff]
        %v492 = vld [vmem:[%s475 + $0x80] sm:$0xff]
        %v493 = vld [vmem:[%s475 + $0x88] sm:$0xff]
        %v494 = vld [vmem:[%s475 + $0x90] sm:$0xff]
        %v495 = vld [vmem:[%s475 + $0x98] sm:$0xff]
        %496 = vst.msk [vmem:[#allocation3 + $0x8] sm:$0xff] %vm453, %v476
        %497 = vst.msk [vmem:[#allocation3 + $0x20] sm:$0xff] %vm453, %v477
        %498 = vst.msk [vmem:[#allocation3 + $0x38] sm:$0xff] %vm453, %v478
        %499 = vst.msk [vmem:[#allocation3 + $0x50] sm:$0xff] %vm453, %v479
        %500 = vst.msk [vmem:[#allocation3 + $0x68] sm:$0xff] %vm453, %v480
        %501 = vst.msk [vmem:[#allocation3 + $0x80] sm:$0xff] %vm453, %v481
        %502 = vst.msk [vmem:[#allocation3 + $0x98] sm:$0xff] %vm453, %v482
        %503 = vst.msk [vmem:[#allocation3 + $0xb0] sm:$0xff] %vm453, %v483
        %504 = vst.msk [vmem:[#allocation3 + $0xc8] sm:$0xff] %vm453, %v484
        %505 = vst.msk [vmem:[#allocation3 + $0xe0] sm:$0xff] %vm453, %v485
        %506 = vst.msk [vmem:[#allocation3 + $0xf8] sm:$0xff] %vm453, %v486
        %507 = vst.msk [vmem:[#allocation3 + $0x110] sm:$0xff] %vm453, %v487
        %508 = vst.msk [vmem:[#allocation3 + $0x128] sm:$0xff] %vm453, %v488
        %509 = vst.msk [vmem:[#allocation3 + $0x140] sm:$0xff] %vm453, %v489
        %510 = vst.msk [vmem:[#allocation3 + $0x158] sm:$0xff] %vm453, %v490
        %511 = vst.msk [vmem:[#allocation3 + $0x170] sm:$0xff] %vm453, %v491
        %512 = vst.msk [vmem:[#allocation3 + $0x188] sm:$0xff] %vm453, %v492
        %513 = vst.msk [vmem:[#allocation3 + $0x1a0] sm:$0xff] %vm453, %v493
        %514 = vst.msk [vmem:[#allocation3 + $0x1b8] sm:$0xff] %vm453, %v494
        %515 = vst.msk [vmem:[#allocation3 + $0x1d0] sm:$0xff] %vm453, %v495
        %s516 = sadd.s32 %s272, 2
        %s517 = scalar_lea.vmem [#allocation2], %s516
        %v518 = vld [vmem:[%s517] sm:$0xff]
        %v519 = vld [vmem:[%s517 + $0x8] sm:$0xff]
        %v520 = vld [vmem:[%s517 + $0x10] sm:$0xff]
        %v521 = vld [vmem:[%s517 + $0x18] sm:$0xff]
        %v522 = vld [vmem:[%s517 + $0x20] sm:$0xff]
        %v523 = vld [vmem:[%s517 + $0x28] sm:$0xff]
        %v524 = vld [vmem:[%s517 + $0x30] sm:$0xff]
        %v525 = vld [vmem:[%s517 + $0x38] sm:$0xff]
        %v526 = vld [vmem:[%s517 + $0x40] sm:$0xff]
        %v527 = vld [vmem:[%s517 + $0x48] sm:$0xff]
        %v528 = vld [vmem:[%s517 + $0x50] sm:$0xff]
        %v529 = vld [vmem:[%s517 + $0x58] sm:$0xff]
        %v530 = vld [vmem:[%s517 + $0x60] sm:$0xff]
        %v531 = vld [vmem:[%s517 + $0x68] sm:$0xff]
        %v532 = vld [vmem:[%s517 + $0x70] sm:$0xff]
        %v533 = vld [vmem:[%s517 + $0x78] sm:$0xff]
        %v534 = vld [vmem:[%s517 + $0x80] sm:$0xff]
        %v535 = vld [vmem:[%s517 + $0x88] sm:$0xff]
        %v536 = vld [vmem:[%s517 + $0x90] sm:$0xff]
        %v537 = vld [vmem:[%s517 + $0x98] sm:$0xff]
        %538 = vst.msk [vmem:[#allocation3 + $0x10] sm:$0xff] %vm453, %v518
        %539 = vst.msk [vmem:[#allocation3 + $0x28] sm:$0xff] %vm453, %v519
        %540 = vst.msk [vmem:[#allocation3 + $0x40] sm:$0xff] %vm453, %v520
        %541 = vst.msk [vmem:[#allocation3 + $0x58] sm:$0xff] %vm453, %v521
        %542 = vst.msk [vmem:[#allocation3 + $0x70] sm:$0xff] %vm453, %v522
        %543 = vst.msk [vmem:[#allocation3 + $0x88] sm:$0xff] %vm453, %v523
        %544 = vst.msk [vmem:[#allocation3 + $0xa0] sm:$0xff] %vm453, %v524
        %545 = vst.msk [vmem:[#allocation3 + $0xb8] sm:$0xff] %vm453, %v525
        %546 = vst.msk [vmem:[#allocation3 + $0xd0] sm:$0xff] %vm453, %v526
        %547 = vst.msk [vmem:[#allocation3 + $0xe8] sm:$0xff] %vm453, %v527
        %548 = vst.msk [vmem:[#allocation3 + $0x100] sm:$0xff] %vm453, %v528
        %549 = vst.msk [vmem:[#allocation3 + $0x118] sm:$0xff] %vm453, %v529
        %550 = vst.msk [vmem:[#allocation3 + $0x130] sm:$0xff] %vm453, %v530
        %551 = vst.msk [vmem:[#allocation3 + $0x148] sm:$0xff] %vm453, %v531
        %552 = vst.msk [vmem:[#allocation3 + $0x160] sm:$0xff] %vm453, %v532
        %553 = vst.msk [vmem:[#allocation3 + $0x178] sm:$0xff] %vm453, %v533
        %554 = vst.msk [vmem:[#allocation3 + $0x190] sm:$0xff] %vm453, %v534
        %555 = vst.msk [vmem:[#allocation3 + $0x1a8] sm:$0xff] %vm453, %v535
        %556 = vst.msk [vmem:[#allocation3 + $0x1c0] sm:$0xff] %vm453, %v536
        %557 = vst.msk [vmem:[#allocation3 + $0x1d8] sm:$0xff] %vm453, %v537
        %v558 = vld [vmem:[#allocation3] sm:$0xff]
        %v559 = vld [vmem:[#allocation3 + $0x8] sm:$0xff]
        %v560 = vld [vmem:[#allocation3 + $0x10] sm:$0xff]
        %v561 = vld [vmem:[#allocation3 + $0x18] sm:$0xff]
        %v562 = vld [vmem:[#allocation3 + $0x20] sm:$0xff]
        %v563 = vld [vmem:[#allocation3 + $0x28] sm:$0xff]
        %v564 = vld [vmem:[#allocation3 + $0x30] sm:$0xff]
        %v565 = vld [vmem:[#allocation3 + $0x38] sm:$0xff]
        %v566 = vld [vmem:[#allocation3 + $0x40] sm:$0xff]
        %v567 = vld [vmem:[#allocation3 + $0x48] sm:$0xff]
        %v568 = vld [vmem:[#allocation3 + $0x50] sm:$0xff]
        %v569 = vld [vmem:[#allocation3 + $0x58] sm:$0xff]
        %v570 = vld [vmem:[#allocation3 + $0x60] sm:$0xff]
        %v571 = vld [vmem:[#allocation3 + $0x68] sm:$0xff]
        %v572 = vld [vmem:[#allocation3 + $0x70] sm:$0xff]
        %v573 = vld [vmem:[#allocation3 + $0x78] sm:$0xff]
        %v574 = vld [vmem:[#allocation3 + $0x80] sm:$0xff]
        %v575 = vld [vmem:[#allocation3 + $0x88] sm:$0xff]
        %v576 = vld [vmem:[#allocation3 + $0x90] sm:$0xff]
        %v577 = vld [vmem:[#allocation3 + $0x98] sm:$0xff]
        %v578 = vld [vmem:[#allocation3 + $0xa0] sm:$0xff]
        %v579 = vld [vmem:[#allocation3 + $0xa8] sm:$0xff]
        %v580 = vld [vmem:[#allocation3 + $0xb0] sm:$0xff]
        %v581 = vld [vmem:[#allocation3 + $0xb8] sm:$0xff]
        %v582 = vld [vmem:[#allocation3 + $0xc0] sm:$0xff]
        %v583 = vld [vmem:[#allocation3 + $0xc8] sm:$0xff]
        %v584 = vld [vmem:[#allocation3 + $0xd0] sm:$0xff]
        %v585 = vld [vmem:[#allocation3 + $0xd8] sm:$0xff]
        %v586 = vld [vmem:[#allocation3 + $0xe0] sm:$0xff]
        %v587 = vld [vmem:[#allocation3 + $0xe8] sm:$0xff]
        %v588 = vld [vmem:[#allocation3 + $0xf0] sm:$0xff]
        %v589 = vld [vmem:[#allocation3 + $0xf8] sm:$0xff]
        %v590 = vld [vmem:[#allocation3 + $0x100] sm:$0xff]
        %v591 = vld [vmem:[#allocation3 + $0x108] sm:$0xff]
        %v592 = vld [vmem:[#allocation3 + $0x110] sm:$0xff]
        %v593 = vld [vmem:[#allocation3 + $0x118] sm:$0xff]
        %v594 = vld [vmem:[#allocation3 + $0x120] sm:$0xff]
        %v595 = vld [vmem:[#allocation3 + $0x128] sm:$0xff]
        %v596 = vld [vmem:[#allocation3 + $0x130] sm:$0xff]
        %v597 = vld [vmem:[#allocation3 + $0x138] sm:$0xff]
        %v598 = vld [vmem:[#allocation3 + $0x140] sm:$0xff]
        %v599 = vld [vmem:[#allocation3 + $0x148] sm:$0xff]
        %v600 = vld [vmem:[#allocation3 + $0x150] sm:$0xff]
        %v601 = vld [vmem:[#allocation3 + $0x158] sm:$0xff]
        %v602 = vld [vmem:[#allocation3 + $0x160] sm:$0xff]
        %v603 = vld [vmem:[#allocation3 + $0x168] sm:$0xff]
        %v604 = vld [vmem:[#allocation3 + $0x170] sm:$0xff]
        %v605 = vld [vmem:[#allocation3 + $0x178] sm:$0xff]
        %v606 = vld [vmem:[#allocation5] sm:$0xff]
        %v607 = vld [vmem:[#allocation5 + $0x8] sm:$0xff]
        %v608 = vld [vmem:[#allocation5 + $0x10] sm:$0xff]
        %v609 = vld [vmem:[#allocation5 + $0x18] sm:$0xff]
        %v610 = vld [vmem:[#allocation5 + $0x20] sm:$0xff]
        %v611 = vld [vmem:[#allocation5 + $0x28] sm:$0xff]
        %v612 = vld [vmem:[#allocation5 + $0x30] sm:$0xff]
        %v613 = vld [vmem:[#allocation5 + $0x38] sm:$0xff]
        %v614 = vld [vmem:[#allocation5 + $0x40] sm:$0xff]
        %v615 = vld [vmem:[#allocation5 + $0x48] sm:$0xff]
        %v616 = vld [vmem:[#allocation5 + $0x50] sm:$0xff]
        %v617 = vld [vmem:[#allocation5 + $0x58] sm:$0xff]
        %v618 = vld [vmem:[#allocation5 + $0x60] sm:$0xff]
        %v619 = vld [vmem:[#allocation5 + $0x68] sm:$0xff]
        %v620 = vld [vmem:[#allocation5 + $0x70] sm:$0xff]
        %v621 = vld [vmem:[#allocation5 + $0x78] sm:$0xff]
        %v622 = vld [vmem:[#allocation5 + $0x80] sm:$0xff]
        %v623 = vld [vmem:[#allocation5 + $0x88] sm:$0xff]
        %v624 = vld [vmem:[#allocation5 + $0x90] sm:$0xff]
        %v625 = vld [vmem:[#allocation5 + $0x98] sm:$0xff]
        %v626 = vld [vmem:[#allocation5 + $0xa0] sm:$0xff]
        %v627 = vld [vmem:[#allocation5 + $0xa8] sm:$0xff]
        %v628 = vld [vmem:[#allocation5 + $0xb0] sm:$0xff]
        %v629 = vld [vmem:[#allocation5 + $0xb8] sm:$0xff]
        %v630 = vld [vmem:[#allocation5 + $0xc0] sm:$0xff]
        %v631 = vld [vmem:[#allocation5 + $0xc8] sm:$0xff]
        %v632 = vld [vmem:[#allocation5 + $0xd0] sm:$0xff]
        %v633 = vld [vmem:[#allocation5 + $0xd8] sm:$0xff]
        %v634 = vld [vmem:[#allocation5 + $0xe0] sm:$0xff]
        %v635 = vld [vmem:[#allocation5 + $0xe8] sm:$0xff]
        %v636 = vld [vmem:[#allocation5 + $0xf0] sm:$0xff]
        %v637 = vld [vmem:[#allocation5 + $0xf8] sm:$0xff]
        %v638 = vld [vmem:[#allocation5 + $0x100] sm:$0xff]
        %v639 = vld [vmem:[#allocation5 + $0x108] sm:$0xff]
        %v640 = vld [vmem:[#allocation5 + $0x110] sm:$0xff]
        %v641 = vld [vmem:[#allocation5 + $0x118] sm:$0xff]
        %v642 = vld [vmem:[#allocation5 + $0x120] sm:$0xff]
        %v643 = vld [vmem:[#allocation5 + $0x128] sm:$0xff]
        %v644 = vld [vmem:[#allocation5 + $0x130] sm:$0xff]
        %v645 = vld [vmem:[#allocation5 + $0x138] sm:$0xff]
        %v646 = vld [vmem:[#allocation5 + $0x140] sm:$0xff]
        %v647 = vld [vmem:[#allocation5 + $0x148] sm:$0xff]
        %v648 = vld [vmem:[#allocation5 + $0x150] sm:$0xff]
        %v649 = vld [vmem:[#allocation5 + $0x158] sm:$0xff]
        %v650 = vld [vmem:[#allocation5 + $0x160] sm:$0xff]
        %v651 = vld [vmem:[#allocation5 + $0x168] sm:$0xff]
        %v652 = vld [vmem:[#allocation5 + $0x170] sm:$0xff]
        %v653 = vld [vmem:[#allocation5 + $0x178] sm:$0xff]
        %v654 = vld [vmem:[#allocation3 + $0x180] sm:$0xff]
        %v655 = vld [vmem:[#allocation3 + $0x188] sm:$0xff]
        %v656 = vld [vmem:[#allocation3 + $0x190] sm:$0xff]
        %v657 = vld [vmem:[#allocation3 + $0x198] sm:$0xff]
        %v658 = vld [vmem:[#allocation3 + $0x1a0] sm:$0xff]
        %v659 = vld [vmem:[#allocation3 + $0x1a8] sm:$0xff]
        %s660 = scalar_lea.vmem [#allocation5], 384
        %v661 = vld [vmem:[%s660] sm:$0xff]
        %v662 = vld [vmem:[%s660 + $0x8] sm:$0xff]
        %v663 = vld [vmem:[%s660 + $0x10] sm:$0xff]
        %v664 = vld [vmem:[%s660 + $0x18] sm:$0xff]
        %v665 = vld [vmem:[%s660 + $0x20] sm:$0xff]
        %v666 = vld [vmem:[%s660 + $0x28] sm:$0xff]
        %v667 = vld [vmem:[%s660 + $0x30] sm:$0xff]
        %v668 = vld [vmem:[%s660 + $0x38] sm:$0xff]
        %v669 = vld [vmem:[%s660 + $0x40] sm:$0xff]
        %v670 = vld [vmem:[%s660 + $0x48] sm:$0xff]
        %v671 = vld [vmem:[%s660 + $0x50] sm:$0xff]
        %v672 = vld [vmem:[%s660 + $0x58] sm:$0xff]
        %v673 = vld [vmem:[%s660 + $0x60] sm:$0xff]
        %v674 = vld [vmem:[%s660 + $0x68] sm:$0xff]
        %v675 = vld [vmem:[%s660 + $0x70] sm:$0xff]
        %v676 = vld [vmem:[%s660 + $0x78] sm:$0xff]
        %v677 = vld [vmem:[%s660 + $0x80] sm:$0xff]
        %v678 = vld [vmem:[%s660 + $0x88] sm:$0xff]
        %v679 = vld [vmem:[%s660 + $0x90] sm:$0xff]
        %v680 = vld [vmem:[%s660 + $0x98] sm:$0xff]
        %v681 = vld [vmem:[%s660 + $0xa0] sm:$0xff]
        %v682 = vld [vmem:[%s660 + $0xa8] sm:$0xff]
        %v683 = vld [vmem:[%s660 + $0xb0] sm:$0xff]
        %v684 = vld [vmem:[%s660 + $0xb8] sm:$0xff]
        %v685 = vld [vmem:[%s660 + $0xc0] sm:$0xff]
        %v686 = vld [vmem:[%s660 + $0xc8] sm:$0xff]
        %v687 = vld [vmem:[%s660 + $0xd0] sm:$0xff]
        %v688 = vld [vmem:[%s660 + $0xd8] sm:$0xff]
        %v689 = vld [vmem:[%s660 + $0xe0] sm:$0xff]
        %v690 = vld [vmem:[%s660 + $0xe8] sm:$0xff]
        %v691 = vld [vmem:[%s660 + $0xf0] sm:$0xff]
        %v692 = vld [vmem:[%s660 + $0xf8] sm:$0xff]
        %v693 = vld [vmem:[%s660 + $0x100] sm:$0xff]
        %v694 = vld [vmem:[%s660 + $0x108] sm:$0xff]
        %v695 = vld [vmem:[%s660 + $0x110] sm:$0xff]
        %v696 = vld [vmem:[%s660 + $0x118] sm:$0xff]
        %v697 = vld [vmem:[%s660 + $0x120] sm:$0xff]
        %v698 = vld [vmem:[%s660 + $0x128] sm:$0xff]
        %v699 = vld [vmem:[%s660 + $0x130] sm:$0xff]
        %v700 = vld [vmem:[%s660 + $0x138] sm:$0xff]
        %v701 = vld [vmem:[%s660 + $0x140] sm:$0xff]
        %v702 = vld [vmem:[%s660 + $0x148] sm:$0xff]
        %v703 = vld [vmem:[%s660 + $0x150] sm:$0xff]
        %v704 = vld [vmem:[%s660 + $0x158] sm:$0xff]
        %v705 = vld [vmem:[%s660 + $0x160] sm:$0xff]
        %v706 = vld [vmem:[%s660 + $0x168] sm:$0xff]
        %v707 = vld [vmem:[%s660 + $0x170] sm:$0xff]
        %v708 = vld [vmem:[%s660 + $0x178] sm:$0xff]
        %709 = vmatprep.subr.mxu0 0.0
        %710 = vmatpush1.msra.mxu0 %v676
        %711 = vmatprep.subr.mxu0 0.0
        %712 = vmatpush1.msra.mxu0 %v675
        %713 = vmatprep.subr.mxu0 0.0
        %714 = vmatpush1.msra.mxu0 %v674
        %715 = vmatprep.subr.mxu0 0.0
        %716 = vmatpush1.msra.mxu0 %v673
        %717 = vmatprep.subr.mxu0 0.0
        %718 = vmatpush1.msra.mxu0 %v672
        %719 = vmatprep.subr.mxu0 0.0
        %720 = vmatpush1.msra.mxu0 %v671
        %721 = vmatprep.subr.mxu0 0.0
        %722 = vmatpush1.msra.mxu0 %v670
        %723 = vmatprep.subr.mxu0 0.0
        %724 = vmatpush1.msra.mxu0 %v669
        %725 = vmatprep.subr.mxu0 0.0
        %726 = vmatpush1.msra.mxu0 %v668
        %727 = vmatprep.subr.mxu0 0.0
        %728 = vmatpush1.msra.mxu0 %v667
        %729 = vmatprep.subr.mxu0 0.0
        %730 = vmatpush1.msra.mxu0 %v666
        %731 = vmatprep.subr.mxu0 0.0
        %732 = vmatpush1.msra.mxu0 %v665
        %733 = vmatprep.subr.mxu0 0.0
        %734 = vmatpush1.msra.mxu0 %v664
        %735 = vmatprep.subr.mxu0 0.0
        %736 = vmatpush1.msra.mxu0 %v663
        %737 = vmatprep.subr.mxu0 0.0
        %738 = vmatpush1.msra.mxu0 %v662
        %739 = vmatprep.subr.mxu0 0.0
        %740 = vmatpush1.msra.mxu0 %v661
        %741 = vmatprep.subr.mxu0 0.0
        %742 = vmatpush2.msra.mxu0 %v692
        %743 = vmatprep.subr.mxu0 0.0
        %744 = vmatpush2.msra.mxu0 %v691
        %745 = vmatprep.subr.mxu0 0.0
        %746 = vmatpush2.msra.mxu0 %v690
        %747 = vmatprep.subr.mxu0 0.0
        %748 = vmatpush2.msra.mxu0 %v689
        %749 = vmatprep.subr.mxu0 0.0
        %750 = vmatpush2.msra.mxu0 %v688
        %751 = vmatprep.subr.mxu0 0.0
        %752 = vmatpush2.msra.mxu0 %v687
        %753 = vmatprep.subr.mxu0 0.0
        %754 = vmatpush2.msra.mxu0 %v686
        %755 = vmatprep.subr.mxu0 0.0
        %756 = vmatpush2.msra.mxu0 %v685
        %757 = vmatprep.subr.mxu0 0.0
        %758 = vmatpush2.msra.mxu0 %v684
        %759 = vmatprep.subr.mxu0 0.0
        %760 = vmatpush2.msra.mxu0 %v683
        %761 = vmatprep.subr.mxu0 0.0
        %762 = vmatpush2.msra.mxu0 %v682
        %763 = vmatprep.subr.mxu0 0.0
        %764 = vmatpush2.msra.mxu0 %v681
        %765 = vmatprep.subr.mxu0 0.0
        %766 = vmatpush2.msra.mxu0 %v680
        %767 = vmatprep.subr.mxu0 0.0
        %768 = vmatpush2.msra.mxu0 %v679
        %769 = vmatprep.subr.mxu0 0.0
        %770 = vmatpush2.msra.mxu0 %v678
        %771 = vmatprep.subr.mxu0 0.0
        %772 = vmatpush2.msra.mxu0 %v677
        %773 = vmatprep.mubr.f32.mxu0 %v565
        %774 = vmatmul.mubr.f32.gmra.mxu0 %v564
        %v775 = vpop.f32.mrf.mxu0
        %v776 = vadd.f32 0.0, %v775
        %v777 = vpop.f32.mrf.mxu0
        %778 = vmatprep.mubr.f32.mxu0 %v568
        %779 = vmatmul.mubr.f32.gmra.mxu0 %v567
        %v780 = vpop.f32.mrf.mxu0
        %v781 = vadd.f32 0.0, %v780
        %v782 = vpop.f32.mrf.mxu0
        %783 = vmatprep.mubr.f32.mxu0 %v571
        %784 = vmatmul.mubr.f32.gmra.mxu0 %v570
        %v785 = vpop.f32.mrf.mxu0
        %v786 = vadd.f32 0.0, %v785
        %v787 = vpop.f32.mrf.mxu0
        %788 = vmatprep.mubr.f32.mxu0 %v574
        %789 = vmatmul.mubr.f32.gmra.mxu0 %v573
        %v790 = vpop.f32.mrf.mxu0
        %v791 = vadd.f32 0.0, %v790
        %v792 = vpop.f32.mrf.mxu0
        %793 = vmatprep.mubr.f32.mxu0 %v577
        %794 = vmatmul.mubr.f32.gmra.mxu0 %v576
        %v795 = vpop.f32.mrf.mxu0
        %v796 = vadd.f32 0.0, %v795
        %v797 = vpop.f32.mrf.mxu0
        %798 = vmatprep.mubr.f32.mxu0 %v580
        %799 = vmatmul.mubr.f32.gmra.mxu0 %v579
        %v800 = vpop.f32.mrf.mxu0
        %v801 = vadd.f32 0.0, %v800
        %v802 = vpop.f32.mrf.mxu0
        %803 = vmatprep.mubr.f32.mxu0 %v583
        %804 = vmatmul.mubr.f32.gmra.mxu0 %v582
        %v805 = vpop.f32.mrf.mxu0
        %v806 = vadd.f32 0.0, %v805
        %v807 = vpop.f32.mrf.mxu0
        %808 = vmatprep.mubr.f32.mxu0 %v586
        %809 = vmatmul.mubr.f32.gmra.mxu0 %v585
        %v810 = vpop.f32.mrf.mxu0
        %v811 = vadd.f32 0.0, %v810
        %v812 = vpop.f32.mrf.mxu0
        %813 = vmatprep.mubr.f32.mxu0 %v589
        %814 = vmatmul.mubr.f32.gmra.mxu0 %v588
        %v815 = vpop.f32.mrf.mxu0
        %v816 = vadd.f32 0.0, %v815
        %v817 = vpop.f32.mrf.mxu0
        %818 = vmatprep.mubr.f32.mxu0 %v592
        %819 = vmatmul.mubr.f32.gmra.mxu0 %v591
        %v820 = vpop.f32.mrf.mxu0
        %v821 = vadd.f32 0.0, %v820
        %v822 = vpop.f32.mrf.mxu0
        %823 = vmatprep.mubr.f32.mxu0 %v595
        %824 = vmatmul.mubr.f32.gmra.mxu0 %v594
        %v825 = vpop.f32.mrf.mxu0
        %v826 = vadd.f32 0.0, %v825
        %v827 = vpop.f32.mrf.mxu0
        %828 = vmatprep.mubr.f32.mxu0 %v598
        %829 = vmatmul.mubr.f32.gmra.mxu0 %v597
        %v830 = vpop.f32.mrf.mxu0
        %v831 = vadd.f32 0.0, %v830
        %v832 = vpop.f32.mrf.mxu0
        %833 = vmatprep.mubr.f32.mxu0 %v601
        %834 = vmatmul.mubr.f32.gmra.mxu0 %v600
        %v835 = vpop.f32.mrf.mxu0
        %v836 = vadd.f32 0.0, %v835
        %v837 = vpop.f32.mrf.mxu0
        %838 = vmatprep.mubr.f32.mxu0 %v604
        %839 = vmatmul.mubr.f32.gmra.mxu0 %v603
        %v840 = vpop.f32.mrf.mxu0
        %v841 = vadd.f32 0.0, %v840
        %v842 = vpop.f32.mrf.mxu0
        %843 = vmatprep.mubr.f32.mxu0 %v655
        %844 = vmatmul.mubr.f32.gmra.mxu0 %v654
        %v845 = vpop.f32.mrf.mxu0
        %v846 = vadd.f32 0.0, %v845
        %v847 = vpop.f32.mrf.mxu0
        %848 = vmatprep.mubr.f32.mxu0 %v658
        %849 = vmatmul.mubr.f32.gmra.mxu0 %v657
        %v850 = vpop.f32.mrf.mxu0
        %v851 = vadd.f32 0.0, %v850
        %v852 = vpop.f32.mrf.mxu0
        %853 = vdwg.mxu0
        %854 = vmatprep.subr.mxu0 0.0
        %855 = vmatpush1.msra.mxu0 %v708
        %856 = vmatprep.subr.mxu0 0.0
        %857 = vmatpush1.msra.mxu0 %v707
        %858 = vmatprep.subr.mxu0 0.0
        %859 = vmatpush1.msra.mxu0 %v706
        %860 = vmatprep.subr.mxu0 0.0
        %861 = vmatpush1.msra.mxu0 %v705
        %862 = vmatprep.subr.mxu0 0.0
        %863 = vmatpush1.msra.mxu0 %v704
        %864 = vmatprep.subr.mxu0 0.0
        %865 = vmatpush1.msra.mxu0 %v703
        %866 = vmatprep.subr.mxu0 0.0
        %867 = vmatpush1.msra.mxu0 %v702
        %868 = vmatprep.subr.mxu0 0.0
        %869 = vmatpush1.msra.mxu0 %v701
        %870 = vmatprep.subr.mxu0 0.0
        %871 = vmatpush1.msra.mxu0 %v700
        %872 = vmatprep.subr.mxu0 0.0
        %873 = vmatpush1.msra.mxu0 %v699
        %874 = vmatprep.subr.mxu0 0.0
        %875 = vmatpush1.msra.mxu0 %v698
        %876 = vmatprep.subr.mxu0 0.0
        %877 = vmatpush1.msra.mxu0 %v697
        %878 = vmatprep.subr.mxu0 0.0
        %879 = vmatpush1.msra.mxu0 %v696
        %880 = vmatprep.subr.mxu0 0.0
        %881 = vmatpush1.msra.mxu0 %v695
        %882 = vmatprep.subr.mxu0 0.0
        %883 = vmatpush1.msra.mxu0 %v694
        %884 = vmatprep.subr.mxu0 0.0
        %885 = vmatpush1.msra.mxu0 %v693
        %886 = vmatprep.subr.mxu0 0.0
        %887 = vmatpush2.msra.mxu0 0.0
        %888 = vmatprep.subr.mxu0 0.0
        %889 = vmatpush2.msra.mxu0 0.0
        %890 = vmatprep.subr.mxu0 0.0
        %891 = vmatpush2.msra.mxu0 0.0
        %892 = vmatprep.subr.mxu0 0.0
        %893 = vmatpush2.msra.mxu0 0.0
        %894 = vmatprep.subr.mxu0 0.0
        %895 = vmatpush2.msra.mxu0 0.0
        %896 = vmatprep.subr.mxu0 0.0
        %897 = vmatpush2.msra.mxu0 0.0
        %898 = vmatprep.subr.mxu0 0.0
        %899 = vmatpush2.msra.mxu0 0.0
        %900 = vmatprep.subr.mxu0 0.0
        %901 = vmatpush2.msra.mxu0 0.0
        %902 = vmatprep.subr.mxu0 0.0
        %903 = vmatpush2.msra.mxu0 0.0
        %904 = vmatprep.subr.mxu0 0.0
        %905 = vmatpush2.msra.mxu0 0.0
        %906 = vmatprep.subr.mxu0 0.0
        %907 = vmatpush2.msra.mxu0 0.0
        %908 = vmatprep.subr.mxu0 0.0
        %909 = vmatpush2.msra.mxu0 0.0
        %910 = vmatprep.subr.mxu0 0.0
        %911 = vmatpush2.msra.mxu0 0.0
        %912 = vmatprep.subr.mxu0 0.0
        %913 = vmatpush2.msra.mxu0 0.0
        %914 = vmatprep.subr.mxu0 0.0
        %915 = vmatpush2.msra.mxu0 0.0
        %916 = vmatprep.subr.mxu0 0.0
        %917 = vmatpush2.msra.mxu0 0.0
        %918 = vmatprep.mubr.f32.mxu0 0.0
        %919 = vmatmul.mubr.f32.gmra.mxu0 %v566
        %v920 = vpop.f32.mrf.mxu0
        %v921 = vadd.f32 %v776, %v920
        %v922 = vpop.f32.mrf.mxu0
        %923 = vmatprep.mubr.f32.mxu0 0.0
        %924 = vmatmul.mubr.f32.gmra.mxu0 %v569
        %v925 = vpop.f32.mrf.mxu0
        %v926 = vadd.f32 %v781, %v925
        %v927 = vpop.f32.mrf.mxu0
        %928 = vmatprep.mubr.f32.mxu0 0.0
        %929 = vmatmul.mubr.f32.gmra.mxu0 %v572
        %v930 = vpop.f32.mrf.mxu0
        %v931 = vadd.f32 %v786, %v930
        %v932 = vpop.f32.mrf.mxu0
        %933 = vmatprep.mubr.f32.mxu0 0.0
        %934 = vmatmul.mubr.f32.gmra.mxu0 %v575
        %v935 = vpop.f32.mrf.mxu0
        %v936 = vadd.f32 %v791, %v935
        %v937 = vpop.f32.mrf.mxu0
        %938 = vmatprep.mubr.f32.mxu0 0.0
        %939 = vmatmul.mubr.f32.gmra.mxu0 %v578
        %v940 = vpop.f32.mrf.mxu0
        %v941 = vadd.f32 %v796, %v940
        %v942 = vpop.f32.mrf.mxu0
        %943 = vmatprep.mubr.f32.mxu0 0.0
        %944 = vmatmul.mubr.f32.gmra.mxu0 %v581
        %v945 = vpop.f32.mrf.mxu0
        %v946 = vadd.f32 %v801, %v945
        %v947 = vpop.f32.mrf.mxu0
        %948 = vmatprep.mubr.f32.mxu0 0.0
        %949 = vmatmul.mubr.f32.gmra.mxu0 %v584
        %v950 = vpop.f32.mrf.mxu0
        %v951 = vadd.f32 %v806, %v950
        %v952 = vpop.f32.mrf.mxu0
        %953 = vmatprep.mubr.f32.mxu0 0.0
        %954 = vmatmul.mubr.f32.gmra.mxu0 %v587
        %v955 = vpop.f32.mrf.mxu0
        %v956 = vadd.f32 %v811, %v955
        %v957 = vpop.f32.mrf.mxu0
        %958 = vmatprep.mubr.f32.mxu0 0.0
        %959 = vmatmul.mubr.f32.gmra.mxu0 %v590
        %v960 = vpop.f32.mrf.mxu0
        %v961 = vadd.f32 %v816, %v960
        %v962 = vpop.f32.mrf.mxu0
        %963 = vmatprep.mubr.f32.mxu0 0.0
        %964 = vmatmul.mubr.f32.gmra.mxu0 %v593
        %v965 = vpop.f32.mrf.mxu0
        %v966 = vadd.f32 %v821, %v965
        %v967 = vpop.f32.mrf.mxu0
        %968 = vmatprep.mubr.f32.mxu0 0.0
        %969 = vmatmul.mubr.f32.gmra.mxu0 %v596
        %v970 = vpop.f32.mrf.mxu0
        %v971 = vadd.f32 %v826, %v970
        %v972 = vpop.f32.mrf.mxu0
        %973 = vmatprep.mubr.f32.mxu0 0.0
        %974 = vmatmul.mubr.f32.gmra.mxu0 %v599
        %v975 = vpop.f32.mrf.mxu0
        %v976 = vadd.f32 %v831, %v975
        %v977 = vpop.f32.mrf.mxu0
        %978 = vmatprep.mubr.f32.mxu0 0.0
        %979 = vmatmul.mubr.f32.gmra.mxu0 %v602
        %v980 = vpop.f32.mrf.mxu0
        %v981 = vadd.f32 %v836, %v980
        %v982 = vpop.f32.mrf.mxu0
        %983 = vmatprep.mubr.f32.mxu0 0.0
        %984 = vmatmul.mubr.f32.gmra.mxu0 %v605
        %v985 = vpop.f32.mrf.mxu0
        %v986 = vadd.f32 %v841, %v985
        %v987 = vpop.f32.mrf.mxu0
        %988 = vmatprep.mubr.f32.mxu0 0.0
        %989 = vmatmul.mubr.f32.gmra.mxu0 %v656
        %v990 = vpop.f32.mrf.mxu0
        %v991 = vadd.f32 %v846, %v990
        %v992 = vpop.f32.mrf.mxu0
        %993 = vmatprep.mubr.f32.mxu0 0.0
        %994 = vmatmul.mubr.f32.gmra.mxu0 %v659
        %v995 = vpop.f32.mrf.mxu0
        %v996 = vadd.f32 %v851, %v995
        %v997 = vpop.f32.mrf.mxu0
        %998 = vdwg.mxu0
        %999 = vmatprep.subr.mxu0 0.0
        %1000 = vmatpush1.msra.mxu0 %v621
        %1001 = vmatprep.subr.mxu0 0.0
        %1002 = vmatpush1.msra.mxu0 %v620
        %1003 = vmatprep.subr.mxu0 0.0
        %1004 = vmatpush1.msra.mxu0 %v619
        %1005 = vmatprep.subr.mxu0 0.0
        %1006 = vmatpush1.msra.mxu0 %v618
        %1007 = vmatprep.subr.mxu0 0.0
        %1008 = vmatpush1.msra.mxu0 %v617
        %1009 = vmatprep.subr.mxu0 0.0
        %1010 = vmatpush1.msra.mxu0 %v616
        %1011 = vmatprep.subr.mxu0 0.0
        %1012 = vmatpush1.msra.mxu0 %v615
        %1013 = vmatprep.subr.mxu0 0.0
        %1014 = vmatpush1.msra.mxu0 %v614
        %1015 = vmatprep.subr.mxu0 0.0
        %1016 = vmatpush1.msra.mxu0 %v613
        %1017 = vmatprep.subr.mxu0 0.0
        %1018 = vmatpush1.msra.mxu0 %v612
        %1019 = vmatprep.subr.mxu0 0.0
        %1020 = vmatpush1.msra.mxu0 %v611
        %1021 = vmatprep.subr.mxu0 0.0
        %1022 = vmatpush1.msra.mxu0 %v610
        %1023 = vmatprep.subr.mxu0 0.0
        %1024 = vmatpush1.msra.mxu0 %v609
        %1025 = vmatprep.subr.mxu0 0.0
        %1026 = vmatpush1.msra.mxu0 %v608
        %1027 = vmatprep.subr.mxu0 0.0
        %1028 = vmatpush1.msra.mxu0 %v607
        %1029 = vmatprep.subr.mxu0 0.0
        %1030 = vmatpush1.msra.mxu0 %v606
        %1031 = vmatprep.subr.mxu0 0.0
        %1032 = vmatpush2.msra.mxu0 %v637
        %1033 = vmatprep.subr.mxu0 0.0
        %1034 = vmatpush2.msra.mxu0 %v636
        %1035 = vmatprep.subr.mxu0 0.0
        %1036 = vmatpush2.msra.mxu0 %v635
        %1037 = vmatprep.subr.mxu0 0.0
        %1038 = vmatpush2.msra.mxu0 %v634
        %1039 = vmatprep.subr.mxu0 0.0
        %1040 = vmatpush2.msra.mxu0 %v633
        %1041 = vmatprep.subr.mxu0 0.0
        %1042 = vmatpush2.msra.mxu0 %v632
        %1043 = vmatprep.subr.mxu0 0.0
        %1044 = vmatpush2.msra.mxu0 %v631
        %1045 = vmatprep.subr.mxu0 0.0
        %1046 = vmatpush2.msra.mxu0 %v630
        %1047 = vmatprep.subr.mxu0 0.0
        %1048 = vmatpush2.msra.mxu0 %v629
        %1049 = vmatprep.subr.mxu0 0.0
        %1050 = vmatpush2.msra.mxu0 %v628
        %1051 = vmatprep.subr.mxu0 0.0
        %1052 = vmatpush2.msra.mxu0 %v627
        %1053 = vmatprep.subr.mxu0 0.0
        %1054 = vmatpush2.msra.mxu0 %v626
        %1055 = vmatprep.subr.mxu0 0.0
        %1056 = vmatpush2.msra.mxu0 %v625
        %1057 = vmatprep.subr.mxu0 0.0
        %1058 = vmatpush2.msra.mxu0 %v624
        %1059 = vmatprep.subr.mxu0 0.0
        %1060 = vmatpush2.msra.mxu0 %v623
        %1061 = vmatprep.subr.mxu0 0.0
        %1062 = vmatpush2.msra.mxu0 %v622
        %1063 = vmatprep.mubr.f32.mxu0 %v559
        %1064 = vmatmul.mubr.f32.gmra.mxu0 %v558
        %v1065 = vpop.f32.mrf.mxu0
        %v1066 = vadd.f32 %v921, %v1065
        %v1067 = vpop.f32.mrf.mxu0
        %1068 = vmatprep.mubr.f32.mxu0 %v562
        %1069 = vmatmul.mubr.f32.gmra.mxu0 %v561
        %v1070 = vpop.f32.mrf.mxu0
        %v1071 = vadd.f32 %v926, %v1070
        %v1072 = vpop.f32.mrf.mxu0
        %1073 = vmatprep.mubr.f32.mxu0 %v565
        %1074 = vmatmul.mubr.f32.gmra.mxu0 %v564
        %v1075 = vpop.f32.mrf.mxu0
        %v1076 = vadd.f32 %v931, %v1075
        %v1077 = vpop.f32.mrf.mxu0
        %1078 = vmatprep.mubr.f32.mxu0 %v568
        %1079 = vmatmul.mubr.f32.gmra.mxu0 %v567
        %v1080 = vpop.f32.mrf.mxu0
        %v1081 = vadd.f32 %v936, %v1080
        %v1082 = vpop.f32.mrf.mxu0
        %1083 = vmatprep.mubr.f32.mxu0 %v571
        %1084 = vmatmul.mubr.f32.gmra.mxu0 %v570
        %v1085 = vpop.f32.mrf.mxu0
        %v1086 = vadd.f32 %v941, %v1085
        %v1087 = vpop.f32.mrf.mxu0
        %1088 = vmatprep.mubr.f32.mxu0 %v574
        %1089 = vmatmul.mubr.f32.gmra.mxu0 %v573
        %v1090 = vpop.f32.mrf.mxu0
        %v1091 = vadd.f32 %v946, %v1090
        %v1092 = vpop.f32.mrf.mxu0
        %1093 = vmatprep.mubr.f32.mxu0 %v577
        %1094 = vmatmul.mubr.f32.gmra.mxu0 %v576
        %v1095 = vpop.f32.mrf.mxu0
        %v1096 = vadd.f32 %v951, %v1095
        %v1097 = vpop.f32.mrf.mxu0
        %1098 = vmatprep.mubr.f32.mxu0 %v580
        %1099 = vmatmul.mubr.f32.gmra.mxu0 %v579
        %v1100 = vpop.f32.mrf.mxu0
        %v1101 = vadd.f32 %v956, %v1100
        %v1102 = vpop.f32.mrf.mxu0
        %1103 = vmatprep.mubr.f32.mxu0 %v583
        %1104 = vmatmul.mubr.f32.gmra.mxu0 %v582
        %v1105 = vpop.f32.mrf.mxu0
        %v1106 = vadd.f32 %v961, %v1105
        %v1107 = vpop.f32.mrf.mxu0
        %1108 = vmatprep.mubr.f32.mxu0 %v586
        %1109 = vmatmul.mubr.f32.gmra.mxu0 %v585
        %v1110 = vpop.f32.mrf.mxu0
        %v1111 = vadd.f32 %v966, %v1110
        %v1112 = vpop.f32.mrf.mxu0
        %1113 = vmatprep.mubr.f32.mxu0 %v589
        %1114 = vmatmul.mubr.f32.gmra.mxu0 %v588
        %v1115 = vpop.f32.mrf.mxu0
        %v1116 = vadd.f32 %v971, %v1115
        %v1117 = vpop.f32.mrf.mxu0
        %1118 = vmatprep.mubr.f32.mxu0 %v592
        %1119 = vmatmul.mubr.f32.gmra.mxu0 %v591
        %v1120 = vpop.f32.mrf.mxu0
        %v1121 = vadd.f32 %v976, %v1120
        %v1122 = vpop.f32.mrf.mxu0
        %1123 = vmatprep.mubr.f32.mxu0 %v595
        %1124 = vmatmul.mubr.f32.gmra.mxu0 %v594
        %v1125 = vpop.f32.mrf.mxu0
        %v1126 = vadd.f32 %v981, %v1125
        %v1127 = vpop.f32.mrf.mxu0
        %1128 = vmatprep.mubr.f32.mxu0 %v598
        %1129 = vmatmul.mubr.f32.gmra.mxu0 %v597
        %v1130 = vpop.f32.mrf.mxu0
        %v1131 = vadd.f32 %v986, %v1130
        %v1132 = vpop.f32.mrf.mxu0
        %1133 = vmatprep.mubr.f32.mxu0 %v601
        %1134 = vmatmul.mubr.f32.gmra.mxu0 %v600
        %v1135 = vpop.f32.mrf.mxu0
        %v1136 = vadd.f32 %v991, %v1135
        %v1137 = vpop.f32.mrf.mxu0
        %1138 = vmatprep.mubr.f32.mxu0 %v604
        %1139 = vmatmul.mubr.f32.gmra.mxu0 %v603
        %v1140 = vpop.f32.mrf.mxu0
        %v1141 = vadd.f32 %v996, %v1140
        %v1142 = vpop.f32.mrf.mxu0
        %1143 = vdwg.mxu0
        %1144 = vmatprep.subr.mxu0 0.0
        %1145 = vmatpush1.msra.mxu0 %v653
        %1146 = vmatprep.subr.mxu0 0.0
        %1147 = vmatpush1.msra.mxu0 %v652
        %1148 = vmatprep.subr.mxu0 0.0
        %1149 = vmatpush1.msra.mxu0 %v651
        %1150 = vmatprep.subr.mxu0 0.0
        %1151 = vmatpush1.msra.mxu0 %v650
        %1152 = vmatprep.subr.mxu0 0.0
        %1153 = vmatpush1.msra.mxu0 %v649
        %1154 = vmatprep.subr.mxu0 0.0
        %1155 = vmatpush1.msra.mxu0 %v648
        %1156 = vmatprep.subr.mxu0 0.0
        %1157 = vmatpush1.msra.mxu0 %v647
        %1158 = vmatprep.subr.mxu0 0.0
        %1159 = vmatpush1.msra.mxu0 %v646
        %1160 = vmatprep.subr.mxu0 0.0
        %1161 = vmatpush1.msra.mxu0 %v645
        %1162 = vmatprep.subr.mxu0 0.0
        %1163 = vmatpush1.msra.mxu0 %v644
        %1164 = vmatprep.subr.mxu0 0.0
        %1165 = vmatpush1.msra.mxu0 %v643
        %1166 = vmatprep.subr.mxu0 0.0
        %1167 = vmatpush1.msra.mxu0 %v642
        %1168 = vmatprep.subr.mxu0 0.0
        %1169 = vmatpush1.msra.mxu0 %v641
        %1170 = vmatprep.subr.mxu0 0.0
        %1171 = vmatpush1.msra.mxu0 %v640
        %1172 = vmatprep.subr.mxu0 0.0
        %1173 = vmatpush1.msra.mxu0 %v639
        %1174 = vmatprep.subr.mxu0 0.0
        %1175 = vmatpush1.msra.mxu0 %v638
        %1176 = vmatprep.subr.mxu0 0.0
        %1177 = vmatpush2.msra.mxu0 0.0
        %1178 = vmatprep.subr.mxu0 0.0
        %1179 = vmatpush2.msra.mxu0 0.0
        %1180 = vmatprep.subr.mxu0 0.0
        %1181 = vmatpush2.msra.mxu0 0.0
        %1182 = vmatprep.subr.mxu0 0.0
        %1183 = vmatpush2.msra.mxu0 0.0
        %1184 = vmatprep.subr.mxu0 0.0
        %1185 = vmatpush2.msra.mxu0 0.0
        %1186 = vmatprep.subr.mxu0 0.0
        %1187 = vmatpush2.msra.mxu0 0.0
        %1188 = vmatprep.subr.mxu0 0.0
        %1189 = vmatpush2.msra.mxu0 0.0
        %1190 = vmatprep.subr.mxu0 0.0
        %1191 = vmatpush2.msra.mxu0 0.0
        %1192 = vmatprep.subr.mxu0 0.0
        %1193 = vmatpush2.msra.mxu0 0.0
        %1194 = vmatprep.subr.mxu0 0.0
        %1195 = vmatpush2.msra.mxu0 0.0
        %1196 = vmatprep.subr.mxu0 0.0
        %1197 = vmatpush2.msra.mxu0 0.0
        %1198 = vmatprep.subr.mxu0 0.0
        %1199 = vmatpush2.msra.mxu0 0.0
        %1200 = vmatprep.subr.mxu0 0.0
        %1201 = vmatpush2.msra.mxu0 0.0
        %1202 = vmatprep.subr.mxu0 0.0
        %1203 = vmatpush2.msra.mxu0 0.0
        %1204 = vmatprep.subr.mxu0 0.0
        %1205 = vmatpush2.msra.mxu0 0.0
        %1206 = vmatprep.subr.mxu0 0.0
        %1207 = vmatpush2.msra.mxu0 0.0
        %1208 = vmatprep.mubr.f32.mxu0 0.0
        %1209 = vmatmul.mubr.f32.gmra.mxu0 %v560
        %v1210 = vpop.f32.mrf.mxu0
        %v1211 = vadd.f32 %v1066, %v1210
        %v1212 = vpop.f32.mrf.mxu0
        %1213 = vmatprep.mubr.f32.mxu0 0.0
        %1214 = vmatmul.mubr.f32.gmra.mxu0 %v563
        %v1215 = vpop.f32.mrf.mxu0
        %v1216 = vadd.f32 %v1071, %v1215
        %v1217 = vpop.f32.mrf.mxu0
        %1218 = vmatprep.mubr.f32.mxu0 0.0
        %1219 = vmatmul.mubr.f32.gmra.mxu0 %v566
        %v1220 = vpop.f32.mrf.mxu0
        %v1221 = vadd.f32 %v1076, %v1220
        %v1222 = vpop.f32.mrf.mxu0
        %1223 = vmatprep.mubr.f32.mxu0 0.0
        %1224 = vmatmul.mubr.f32.gmra.mxu0 %v569
        %v1225 = vpop.f32.mrf.mxu0
        %v1226 = vadd.f32 %v1081, %v1225
        %v1227 = vpop.f32.mrf.mxu0
        %1228 = vmatprep.mubr.f32.mxu0 0.0
        %1229 = vmatmul.mubr.f32.gmra.mxu0 %v572
        %v1230 = vpop.f32.mrf.mxu0
        %v1231 = vadd.f32 %v1086, %v1230
        %v1232 = vpop.f32.mrf.mxu0
        %1233 = vmatprep.mubr.f32.mxu0 0.0
        %1234 = vmatmul.mubr.f32.gmra.mxu0 %v575
        %v1235 = vpop.f32.mrf.mxu0
        %v1236 = vadd.f32 %v1091, %v1235
        %v1237 = vpop.f32.mrf.mxu0
        %1238 = vmatprep.mubr.f32.mxu0 0.0
        %1239 = vmatmul.mubr.f32.gmra.mxu0 %v578
        %v1240 = vpop.f32.mrf.mxu0
        %v1241 = vadd.f32 %v1096, %v1240
        %v1242 = vpop.f32.mrf.mxu0
        %1243 = vmatprep.mubr.f32.mxu0 0.0
        %1244 = vmatmul.mubr.f32.gmra.mxu0 %v581
        %v1245 = vpop.f32.mrf.mxu0
        %v1246 = vadd.f32 %v1101, %v1245
        %v1247 = vpop.f32.mrf.mxu0
        %1248 = vmatprep.mubr.f32.mxu0 0.0
        %1249 = vmatmul.mubr.f32.gmra.mxu0 %v584
        %v1250 = vpop.f32.mrf.mxu0
        %v1251 = vadd.f32 %v1106, %v1250
        %v1252 = vpop.f32.mrf.mxu0
        %1253 = vmatprep.mubr.f32.mxu0 0.0
        %1254 = vmatmul.mubr.f32.gmra.mxu0 %v587
        %v1255 = vpop.f32.mrf.mxu0
        %v1256 = vadd.f32 %v1111, %v1255
        %v1257 = vpop.f32.mrf.mxu0
        %1258 = vmatprep.mubr.f32.mxu0 0.0
        %1259 = vmatmul.mubr.f32.gmra.mxu0 %v590
        %v1260 = vpop.f32.mrf.mxu0
        %v1261 = vadd.f32 %v1116, %v1260
        %v1262 = vpop.f32.mrf.mxu0
        %1263 = vmatprep.mubr.f32.mxu0 0.0
        %1264 = vmatmul.mubr.f32.gmra.mxu0 %v593
        %v1265 = vpop.f32.mrf.mxu0
        %v1266 = vadd.f32 %v1121, %v1265
        %v1267 = vpop.f32.mrf.mxu0
        %1268 = vmatprep.mubr.f32.mxu0 0.0
        %1269 = vmatmul.mubr.f32.gmra.mxu0 %v596
        %v1270 = vpop.f32.mrf.mxu0
        %v1271 = vadd.f32 %v1126, %v1270
        %v1272 = vpop.f32.mrf.mxu0
        %1273 = vmatprep.mubr.f32.mxu0 0.0
        %1274 = vmatmul.mubr.f32.gmra.mxu0 %v599
        %v1275 = vpop.f32.mrf.mxu0
        %v1276 = vadd.f32 %v1131, %v1275
        %v1277 = vpop.f32.mrf.mxu0
        %1278 = vmatprep.mubr.f32.mxu0 0.0
        %1279 = vmatmul.mubr.f32.gmra.mxu0 %v602
        %v1280 = vpop.f32.mrf.mxu0
        %v1281 = vadd.f32 %v1136, %v1280
        %v1282 = vpop.f32.mrf.mxu0
        %1283 = vmatprep.mubr.f32.mxu0 0.0
        %1284 = vmatmul.mubr.f32.gmra.mxu0 %v605
        %v1285 = vpop.f32.mrf.mxu0
        %v1286 = vadd.f32 %v1141, %v1285
        %v1287 = vpop.f32.mrf.mxu0
        %1288 = vdwg.mxu0
        %v1289 = vld [vmem:[#allocation3 + $0x60] sm:$0xff]
        %v1290 = vld [vmem:[#allocation3 + $0x68] sm:$0xff]
        %v1291 = vld [vmem:[#allocation3 + $0x70] sm:$0xff]
        %v1292 = vld [vmem:[#allocation3 + $0x78] sm:$0xff]
        %v1293 = vld [vmem:[#allocation3 + $0x80] sm:$0xff]
        %v1294 = vld [vmem:[#allocation3 + $0x88] sm:$0xff]
        %v1295 = vld [vmem:[#allocation3 + $0x90] sm:$0xff]
        %v1296 = vld [vmem:[#allocation3 + $0x98] sm:$0xff]
        %v1297 = vld [vmem:[#allocation3 + $0xa0] sm:$0xff]
        %v1298 = vld [vmem:[#allocation3 + $0xa8] sm:$0xff]
        %v1299 = vld [vmem:[#allocation3 + $0xb0] sm:$0xff]
        %v1300 = vld [vmem:[#allocation3 + $0xb8] sm:$0xff]
        %v1301 = vld [vmem:[#allocation3 + $0xc0] sm:$0xff]
        %v1302 = vld [vmem:[#allocation3 + $0xc8] sm:$0xff]
        %v1303 = vld [vmem:[#allocation3 + $0xd0] sm:$0xff]
        %v1304 = vld [vmem:[#allocation3 + $0xd8] sm:$0xff]
        %v1305 = vld [vmem:[#allocation3 + $0xe0] sm:$0xff]
        %v1306 = vld [vmem:[#allocation3 + $0xe8] sm:$0xff]
        %v1307 = vld [vmem:[#allocation3 + $0xf0] sm:$0xff]
        %v1308 = vld [vmem:[#allocation3 + $0xf8] sm:$0xff]
        %v1309 = vld [vmem:[#allocation3 + $0x100] sm:$0xff]
        %v1310 = vld [vmem:[#allocation3 + $0x108] sm:$0xff]
        %v1311 = vld [vmem:[#allocation3 + $0x110] sm:$0xff]
        %v1312 = vld [vmem:[#allocation3 + $0x118] sm:$0xff]
        %v1313 = vld [vmem:[#allocation3 + $0x120] sm:$0xff]
        %v1314 = vld [vmem:[#allocation3 + $0x128] sm:$0xff]
        %v1315 = vld [vmem:[#allocation3 + $0x130] sm:$0xff]
        %v1316 = vld [vmem:[#allocation3 + $0x138] sm:$0xff]
        %v1317 = vld [vmem:[#allocation3 + $0x140] sm:$0xff]
        %v1318 = vld [vmem:[#allocation3 + $0x148] sm:$0xff]
        %v1319 = vld [vmem:[#allocation3 + $0x150] sm:$0xff]
        %v1320 = vld [vmem:[#allocation3 + $0x158] sm:$0xff]
        %v1321 = vld [vmem:[#allocation3 + $0x160] sm:$0xff]
        %v1322 = vld [vmem:[#allocation3 + $0x168] sm:$0xff]
        %v1323 = vld [vmem:[#allocation3 + $0x170] sm:$0xff]
        %v1324 = vld [vmem:[#allocation3 + $0x178] sm:$0xff]
        %v1325 = vld [vmem:[#allocation3 + $0x180] sm:$0xff]
        %v1326 = vld [vmem:[#allocation3 + $0x188] sm:$0xff]
        %v1327 = vld [vmem:[#allocation3 + $0x190] sm:$0xff]
        %v1328 = vld [vmem:[#allocation3 + $0x198] sm:$0xff]
        %v1329 = vld [vmem:[#allocation3 + $0x1a0] sm:$0xff]
        %v1330 = vld [vmem:[#allocation3 + $0x1a8] sm:$0xff]
        %v1331 = vld [vmem:[#allocation3 + $0x1b0] sm:$0xff]
        %v1332 = vld [vmem:[#allocation3 + $0x1b8] sm:$0xff]
        %v1333 = vld [vmem:[#allocation3 + $0x1c0] sm:$0xff]
        %v1334 = vld [vmem:[#allocation3 + $0x1c8] sm:$0xff]
        %v1335 = vld [vmem:[#allocation3 + $0x1d0] sm:$0xff]
        %v1336 = vld [vmem:[#allocation3 + $0x1d8] sm:$0xff]
        %s1337 = scalar_lea.vmem [#allocation5], 768
        %v1338 = vld [vmem:[%s1337] sm:$0xff]
        %v1339 = vld [vmem:[%s1337 + $0x8] sm:$0xff]
        %v1340 = vld [vmem:[%s1337 + $0x10] sm:$0xff]
        %v1341 = vld [vmem:[%s1337 + $0x18] sm:$0xff]
        %v1342 = vld [vmem:[%s1337 + $0x20] sm:$0xff]
        %v1343 = vld [vmem:[%s1337 + $0x28] sm:$0xff]
        %v1344 = vld [vmem:[%s1337 + $0x30] sm:$0xff]
        %v1345 = vld [vmem:[%s1337 + $0x38] sm:$0xff]
        %v1346 = vld [vmem:[%s1337 + $0x40] sm:$0xff]
        %v1347 = vld [vmem:[%s1337 + $0x48] sm:$0xff]
        %v1348 = vld [vmem:[%s1337 + $0x50] sm:$0xff]
        %v1349 = vld [vmem:[%s1337 + $0x58] sm:$0xff]
        %v1350 = vld [vmem:[%s1337 + $0x60] sm:$0xff]
        %v1351 = vld [vmem:[%s1337 + $0x68] sm:$0xff]
        %v1352 = vld [vmem:[%s1337 + $0x70] sm:$0xff]
        %v1353 = vld [vmem:[%s1337 + $0x78] sm:$0xff]
        %v1354 = vld [vmem:[%s1337 + $0x80] sm:$0xff]
        %v1355 = vld [vmem:[%s1337 + $0x88] sm:$0xff]
        %v1356 = vld [vmem:[%s1337 + $0x90] sm:$0xff]
        %v1357 = vld [vmem:[%s1337 + $0x98] sm:$0xff]
        %v1358 = vld [vmem:[%s1337 + $0xa0] sm:$0xff]
        %v1359 = vld [vmem:[%s1337 + $0xa8] sm:$0xff]
        %v1360 = vld [vmem:[%s1337 + $0xb0] sm:$0xff]
        %v1361 = vld [vmem:[%s1337 + $0xb8] sm:$0xff]
        %v1362 = vld [vmem:[%s1337 + $0xc0] sm:$0xff]
        %v1363 = vld [vmem:[%s1337 + $0xc8] sm:$0xff]
        %v1364 = vld [vmem:[%s1337 + $0xd0] sm:$0xff]
        %v1365 = vld [vmem:[%s1337 + $0xd8] sm:$0xff]
        %v1366 = vld [vmem:[%s1337 + $0xe0] sm:$0xff]
        %v1367 = vld [vmem:[%s1337 + $0xe8] sm:$0xff]
        %v1368 = vld [vmem:[%s1337 + $0xf0] sm:$0xff]
        %v1369 = vld [vmem:[%s1337 + $0xf8] sm:$0xff]
        %v1370 = vld [vmem:[%s1337 + $0x100] sm:$0xff]
        %v1371 = vld [vmem:[%s1337 + $0x108] sm:$0xff]
        %v1372 = vld [vmem:[%s1337 + $0x110] sm:$0xff]
        %v1373 = vld [vmem:[%s1337 + $0x118] sm:$0xff]
        %v1374 = vld [vmem:[%s1337 + $0x120] sm:$0xff]
        %v1375 = vld [vmem:[%s1337 + $0x128] sm:$0xff]
        %v1376 = vld [vmem:[%s1337 + $0x130] sm:$0xff]
        %v1377 = vld [vmem:[%s1337 + $0x138] sm:$0xff]
        %v1378 = vld [vmem:[%s1337 + $0x140] sm:$0xff]
        %v1379 = vld [vmem:[%s1337 + $0x148] sm:$0xff]
        %v1380 = vld [vmem:[%s1337 + $0x150] sm:$0xff]
        %v1381 = vld [vmem:[%s1337 + $0x158] sm:$0xff]
        %v1382 = vld [vmem:[%s1337 + $0x160] sm:$0xff]
        %v1383 = vld [vmem:[%s1337 + $0x168] sm:$0xff]
        %v1384 = vld [vmem:[%s1337 + $0x170] sm:$0xff]
        %v1385 = vld [vmem:[%s1337 + $0x178] sm:$0xff]
        %1386 = vmatprep.subr.mxu0 0.0
        %1387 = vmatpush1.msra.mxu0 %v1353
        %1388 = vmatprep.subr.mxu0 0.0
        %1389 = vmatpush1.msra.mxu0 %v1352
        %1390 = vmatprep.subr.mxu0 0.0
        %1391 = vmatpush1.msra.mxu0 %v1351
        %1392 = vmatprep.subr.mxu0 0.0
        %1393 = vmatpush1.msra.mxu0 %v1350
        %1394 = vmatprep.subr.mxu0 0.0
        %1395 = vmatpush1.msra.mxu0 %v1349
        %1396 = vmatprep.subr.mxu0 0.0
        %1397 = vmatpush1.msra.mxu0 %v1348
        %1398 = vmatprep.subr.mxu0 0.0
        %1399 = vmatpush1.msra.mxu0 %v1347
        %1400 = vmatprep.subr.mxu0 0.0
        %1401 = vmatpush1.msra.mxu0 %v1346
        %1402 = vmatprep.subr.mxu0 0.0
        %1403 = vmatpush1.msra.mxu0 %v1345
        %1404 = vmatprep.subr.mxu0 0.0
        %1405 = vmatpush1.msra.mxu0 %v1344
        %1406 = vmatprep.subr.mxu0 0.0
        %1407 = vmatpush1.msra.mxu0 %v1343
        %1408 = vmatprep.subr.mxu0 0.0
        %1409 = vmatpush1.msra.mxu0 %v1342
        %1410 = vmatprep.subr.mxu0 0.0
        %1411 = vmatpush1.msra.mxu0 %v1341
        %1412 = vmatprep.subr.mxu0 0.0
        %1413 = vmatpush1.msra.mxu0 %v1340
        %1414 = vmatprep.subr.mxu0 0.0
        %1415 = vmatpush1.msra.mxu0 %v1339
        %1416 = vmatprep.subr.mxu0 0.0
        %1417 = vmatpush1.msra.mxu0 %v1338
        %1418 = vmatprep.subr.mxu0 0.0
        %1419 = vmatpush2.msra.mxu0 %v1369
        %1420 = vmatprep.subr.mxu0 0.0
        %1421 = vmatpush2.msra.mxu0 %v1368
        %1422 = vmatprep.subr.mxu0 0.0
        %1423 = vmatpush2.msra.mxu0 %v1367
        %1424 = vmatprep.subr.mxu0 0.0
        %1425 = vmatpush2.msra.mxu0 %v1366
        %1426 = vmatprep.subr.mxu0 0.0
        %1427 = vmatpush2.msra.mxu0 %v1365
        %1428 = vmatprep.subr.mxu0 0.0
        %1429 = vmatpush2.msra.mxu0 %v1364
        %1430 = vmatprep.subr.mxu0 0.0
        %1431 = vmatpush2.msra.mxu0 %v1363
        %1432 = vmatprep.subr.mxu0 0.0
        %1433 = vmatpush2.msra.mxu0 %v1362
        %1434 = vmatprep.subr.mxu0 0.0
        %1435 = vmatpush2.msra.mxu0 %v1361
        %1436 = vmatprep.subr.mxu0 0.0
        %1437 = vmatpush2.msra.mxu0 %v1360
        %1438 = vmatprep.subr.mxu0 0.0
        %1439 = vmatpush2.msra.mxu0 %v1359
        %1440 = vmatprep.subr.mxu0 0.0
        %1441 = vmatpush2.msra.mxu0 %v1358
        %1442 = vmatprep.subr.mxu0 0.0
        %1443 = vmatpush2.msra.mxu0 %v1357
        %1444 = vmatprep.subr.mxu0 0.0
        %1445 = vmatpush2.msra.mxu0 %v1356
        %1446 = vmatprep.subr.mxu0 0.0
        %1447 = vmatpush2.msra.mxu0 %v1355
        %1448 = vmatprep.subr.mxu0 0.0
        %1449 = vmatpush2.msra.mxu0 %v1354
        %1450 = vmatprep.mubr.f32.mxu0 %v1290
        %1451 = vmatmul.mubr.f32.gmra.mxu0 %v1289
        %v1452 = vpop.f32.mrf.mxu0
        %v1453 = vadd.f32 0.0, %v1452
        %v1454 = vpop.f32.mrf.mxu0
        %1455 = vmatprep.mubr.f32.mxu0 %v1293
        %1456 = vmatmul.mubr.f32.gmra.mxu0 %v1292
        %v1457 = vpop.f32.mrf.mxu0
        %v1458 = vadd.f32 0.0, %v1457
        %v1459 = vpop.f32.mrf.mxu0
        %1460 = vmatprep.mubr.f32.mxu0 %v1296
        %1461 = vmatmul.mubr.f32.gmra.mxu0 %v1295
        %v1462 = vpop.f32.mrf.mxu0
        %v1463 = vadd.f32 0.0, %v1462
        %v1464 = vpop.f32.mrf.mxu0
        %1465 = vmatprep.mubr.f32.mxu0 %v1299
        %1466 = vmatmul.mubr.f32.gmra.mxu0 %v1298
        %v1467 = vpop.f32.mrf.mxu0
        %v1468 = vadd.f32 0.0, %v1467
        %v1469 = vpop.f32.mrf.mxu0
        %1470 = vmatprep.mubr.f32.mxu0 %v1302
        %1471 = vmatmul.mubr.f32.gmra.mxu0 %v1301
        %v1472 = vpop.f32.mrf.mxu0
        %v1473 = vadd.f32 0.0, %v1472
        %v1474 = vpop.f32.mrf.mxu0
        %1475 = vmatprep.mubr.f32.mxu0 %v1305
        %1476 = vmatmul.mubr.f32.gmra.mxu0 %v1304
        %v1477 = vpop.f32.mrf.mxu0
        %v1478 = vadd.f32 0.0, %v1477
        %v1479 = vpop.f32.mrf.mxu0
        %1480 = vmatprep.mubr.f32.mxu0 %v1308
        %1481 = vmatmul.mubr.f32.gmra.mxu0 %v1307
        %v1482 = vpop.f32.mrf.mxu0
        %v1483 = vadd.f32 0.0, %v1482
        %v1484 = vpop.f32.mrf.mxu0
        %1485 = vmatprep.mubr.f32.mxu0 %v1311
        %1486 = vmatmul.mubr.f32.gmra.mxu0 %v1310
        %v1487 = vpop.f32.mrf.mxu0
        %v1488 = vadd.f32 0.0, %v1487
        %v1489 = vpop.f32.mrf.mxu0
        %1490 = vmatprep.mubr.f32.mxu0 %v1314
        %1491 = vmatmul.mubr.f32.gmra.mxu0 %v1313
        %v1492 = vpop.f32.mrf.mxu0
        %v1493 = vadd.f32 0.0, %v1492
        %v1494 = vpop.f32.mrf.mxu0
        %1495 = vmatprep.mubr.f32.mxu0 %v1317
        %1496 = vmatmul.mubr.f32.gmra.mxu0 %v1316
        %v1497 = vpop.f32.mrf.mxu0
        %v1498 = vadd.f32 0.0, %v1497
        %v1499 = vpop.f32.mrf.mxu0
        %1500 = vmatprep.mubr.f32.mxu0 %v1320
        %1501 = vmatmul.mubr.f32.gmra.mxu0 %v1319
        %v1502 = vpop.f32.mrf.mxu0
        %v1503 = vadd.f32 0.0, %v1502
        %v1504 = vpop.f32.mrf.mxu0
        %1505 = vmatprep.mubr.f32.mxu0 %v1323
        %1506 = vmatmul.mubr.f32.gmra.mxu0 %v1322
        %v1507 = vpop.f32.mrf.mxu0
        %v1508 = vadd.f32 0.0, %v1507
        %v1509 = vpop.f32.mrf.mxu0
        %1510 = vmatprep.mubr.f32.mxu0 %v1326
        %1511 = vmatmul.mubr.f32.gmra.mxu0 %v1325
        %v1512 = vpop.f32.mrf.mxu0
        %v1513 = vadd.f32 0.0, %v1512
        %v1514 = vpop.f32.mrf.mxu0
        %1515 = vmatprep.mubr.f32.mxu0 %v1329
        %1516 = vmatmul.mubr.f32.gmra.mxu0 %v1328
        %v1517 = vpop.f32.mrf.mxu0
        %v1518 = vadd.f32 0.0, %v1517
        %v1519 = vpop.f32.mrf.mxu0
        %1520 = vmatprep.mubr.f32.mxu0 %v1332
        %1521 = vmatmul.mubr.f32.gmra.mxu0 %v1331
        %v1522 = vpop.f32.mrf.mxu0
        %v1523 = vadd.f32 0.0, %v1522
        %v1524 = vpop.f32.mrf.mxu0
        %1525 = vmatprep.mubr.f32.mxu0 %v1335
        %1526 = vmatmul.mubr.f32.gmra.mxu0 %v1334
        %v1527 = vpop.f32.mrf.mxu0
        %v1528 = vadd.f32 0.0, %v1527
        %v1529 = vpop.f32.mrf.mxu0
        %1530 = vdwg.mxu0
        %1531 = vmatprep.subr.mxu0 0.0
        %1532 = vmatpush1.msra.mxu0 %v1385
        %1533 = vmatprep.subr.mxu0 0.0
        %1534 = vmatpush1.msra.mxu0 %v1384
        %1535 = vmatprep.subr.mxu0 0.0
        %1536 = vmatpush1.msra.mxu0 %v1383
        %1537 = vmatprep.subr.mxu0 0.0
        %1538 = vmatpush1.msra.mxu0 %v1382
        %1539 = vmatprep.subr.mxu0 0.0
        %1540 = vmatpush1.msra.mxu0 %v1381
        %1541 = vmatprep.subr.mxu0 0.0
        %1542 = vmatpush1.msra.mxu0 %v1380
        %1543 = vmatprep.subr.mxu0 0.0
        %1544 = vmatpush1.msra.mxu0 %v1379
        %1545 = vmatprep.subr.mxu0 0.0
        %1546 = vmatpush1.msra.mxu0 %v1378
        %1547 = vmatprep.subr.mxu0 0.0
        %1548 = vmatpush1.msra.mxu0 %v1377
        %1549 = vmatprep.subr.mxu0 0.0
        %1550 = vmatpush1.msra.mxu0 %v1376
        %1551 = vmatprep.subr.mxu0 0.0
        %1552 = vmatpush1.msra.mxu0 %v1375
        %1553 = vmatprep.subr.mxu0 0.0
        %1554 = vmatpush1.msra.mxu0 %v1374
        %1555 = vmatprep.subr.mxu0 0.0
        %1556 = vmatpush1.msra.mxu0 %v1373
        %1557 = vmatprep.subr.mxu0 0.0
        %1558 = vmatpush1.msra.mxu0 %v1372
        %1559 = vmatprep.subr.mxu0 0.0
        %1560 = vmatpush1.msra.mxu0 %v1371
        %1561 = vmatprep.subr.mxu0 0.0
        %1562 = vmatpush1.msra.mxu0 %v1370
        %1563 = vmatprep.subr.mxu0 0.0
        %1564 = vmatpush2.msra.mxu0 0.0
        %1565 = vmatprep.subr.mxu0 0.0
        %1566 = vmatpush2.msra.mxu0 0.0
        %1567 = vmatprep.subr.mxu0 0.0
        %1568 = vmatpush2.msra.mxu0 0.0
        %1569 = vmatprep.subr.mxu0 0.0
        %1570 = vmatpush2.msra.mxu0 0.0
        %1571 = vmatprep.subr.mxu0 0.0
        %1572 = vmatpush2.msra.mxu0 0.0
        %1573 = vmatprep.subr.mxu0 0.0
        %1574 = vmatpush2.msra.mxu0 0.0
        %1575 = vmatprep.subr.mxu0 0.0
        %1576 = vmatpush2.msra.mxu0 0.0
        %1577 = vmatprep.subr.mxu0 0.0
        %1578 = vmatpush2.msra.mxu0 0.0
        %1579 = vmatprep.subr.mxu0 0.0
        %1580 = vmatpush2.msra.mxu0 0.0
        %1581 = vmatprep.subr.mxu0 0.0
        %1582 = vmatpush2.msra.mxu0 0.0
        %1583 = vmatprep.subr.mxu0 0.0
        %1584 = vmatpush2.msra.mxu0 0.0
        %1585 = vmatprep.subr.mxu0 0.0
        %1586 = vmatpush2.msra.mxu0 0.0
        %1587 = vmatprep.subr.mxu0 0.0
        %1588 = vmatpush2.msra.mxu0 0.0
        %1589 = vmatprep.subr.mxu0 0.0
        %1590 = vmatpush2.msra.mxu0 0.0
        %1591 = vmatprep.subr.mxu0 0.0
        %1592 = vmatpush2.msra.mxu0 0.0
        %1593 = vmatprep.subr.mxu0 0.0
        %1594 = vmatpush2.msra.mxu0 0.0
        %1595 = vmatprep.mubr.f32.mxu0 0.0
        %1596 = vmatmul.mubr.f32.gmra.mxu0 %v1291
        %v1597 = vpop.f32.mrf.mxu0
        %v1598 = vadd.f32 %v1453, %v1597
        %v1599 = vpop.f32.mrf.mxu0
        %1600 = vmatprep.mubr.f32.mxu0 0.0
        %1601 = vmatmul.mubr.f32.gmra.mxu0 %v1294
        %v1602 = vpop.f32.mrf.mxu0
        %v1603 = vadd.f32 %v1458, %v1602
        %v1604 = vpop.f32.mrf.mxu0
        %1605 = vmatprep.mubr.f32.mxu0 0.0
        %1606 = vmatmul.mubr.f32.gmra.mxu0 %v1297
        %v1607 = vpop.f32.mrf.mxu0
        %v1608 = vadd.f32 %v1463, %v1607
        %v1609 = vpop.f32.mrf.mxu0
        %1610 = vmatprep.mubr.f32.mxu0 0.0
        %1611 = vmatmul.mubr.f32.gmra.mxu0 %v1300
        %v1612 = vpop.f32.mrf.mxu0
        %v1613 = vadd.f32 %v1468, %v1612
        %v1614 = vpop.f32.mrf.mxu0
        %1615 = vmatprep.mubr.f32.mxu0 0.0
        %1616 = vmatmul.mubr.f32.gmra.mxu0 %v1303
        %v1617 = vpop.f32.mrf.mxu0
        %v1618 = vadd.f32 %v1473, %v1617
        %v1619 = vpop.f32.mrf.mxu0
        %1620 = vmatprep.mubr.f32.mxu0 0.0
        %1621 = vmatmul.mubr.f32.gmra.mxu0 %v1306
        %v1622 = vpop.f32.mrf.mxu0
        %v1623 = vadd.f32 %v1478, %v1622
        %v1624 = vpop.f32.mrf.mxu0
        %1625 = vmatprep.mubr.f32.mxu0 0.0
        %1626 = vmatmul.mubr.f32.gmra.mxu0 %v1309
        %v1627 = vpop.f32.mrf.mxu0
        %v1628 = vadd.f32 %v1483, %v1627
        %v1629 = vpop.f32.mrf.mxu0
        %1630 = vmatprep.mubr.f32.mxu0 0.0
        %1631 = vmatmul.mubr.f32.gmra.mxu0 %v1312
        %v1632 = vpop.f32.mrf.mxu0
        %v1633 = vadd.f32 %v1488, %v1632
        %v1634 = vpop.f32.mrf.mxu0
        %1635 = vmatprep.mubr.f32.mxu0 0.0
        %1636 = vmatmul.mubr.f32.gmra.mxu0 %v1315
        %v1637 = vpop.f32.mrf.mxu0
        %v1638 = vadd.f32 %v1493, %v1637
        %v1639 = vpop.f32.mrf.mxu0
        %1640 = vmatprep.mubr.f32.mxu0 0.0
        %1641 = vmatmul.mubr.f32.gmra.mxu0 %v1318
        %v1642 = vpop.f32.mrf.mxu0
        %v1643 = vadd.f32 %v1498, %v1642
        %v1644 = vpop.f32.mrf.mxu0
        %1645 = vmatprep.mubr.f32.mxu0 0.0
        %1646 = vmatmul.mubr.f32.gmra.mxu0 %v1321
        %v1647 = vpop.f32.mrf.mxu0
        %v1648 = vadd.f32 %v1503, %v1647
        %v1649 = vpop.f32.mrf.mxu0
        %1650 = vmatprep.mubr.f32.mxu0 0.0
        %1651 = vmatmul.mubr.f32.gmra.mxu0 %v1324
        %v1652 = vpop.f32.mrf.mxu0
        %v1653 = vadd.f32 %v1508, %v1652
        %v1654 = vpop.f32.mrf.mxu0
        %1655 = vmatprep.mubr.f32.mxu0 0.0
        %1656 = vmatmul.mubr.f32.gmra.mxu0 %v1327
        %v1657 = vpop.f32.mrf.mxu0
        %v1658 = vadd.f32 %v1513, %v1657
        %v1659 = vpop.f32.mrf.mxu0
        %1660 = vmatprep.mubr.f32.mxu0 0.0
        %1661 = vmatmul.mubr.f32.gmra.mxu0 %v1330
        %v1662 = vpop.f32.mrf.mxu0
        %v1663 = vadd.f32 %v1518, %v1662
        %v1664 = vpop.f32.mrf.mxu0
        %1665 = vmatprep.mubr.f32.mxu0 0.0
        %1666 = vmatmul.mubr.f32.gmra.mxu0 %v1333
        %v1667 = vpop.f32.mrf.mxu0
        %v1668 = vadd.f32 %v1523, %v1667
        %v1669 = vpop.f32.mrf.mxu0
        %1670 = vmatprep.mubr.f32.mxu0 0.0
        %1671 = vmatmul.mubr.f32.gmra.mxu0 %v1336
        %v1672 = vpop.f32.mrf.mxu0
        %v1673 = vadd.f32 %v1528, %v1672
        %v1674 = vpop.f32.mrf.mxu0
        %1675 = vdwg.mxu0
        %v1676 = vadd.f32 %v1211, %v1598
        %v1677 = vadd.f32 %v1216, %v1603
        %v1678 = vadd.f32 %v1221, %v1608
        %v1679 = vadd.f32 %v1226, %v1613
        %v1680 = vadd.f32 %v1231, %v1618
        %v1681 = vadd.f32 %v1236, %v1623
        %v1682 = vadd.f32 %v1241, %v1628
        %v1683 = vadd.f32 %v1246, %v1633
        %v1684 = vadd.f32 %v1251, %v1638
        %v1685 = vadd.f32 %v1256, %v1643
        %v1686 = vadd.f32 %v1261, %v1648
        %v1687 = vadd.f32 %v1266, %v1653
        %v1688 = vadd.f32 %v1271, %v1658
        %v1689 = vadd.f32 %v1276, %v1663
        %v1690 = vadd.f32 %v1281, %v1668
        %v1691 = vadd.f32 %v1286, %v1673
        %v1692 = vld [vmem:[%s2] sm:$0x1]
        %v1693 = vlaneseq
        %v1694 = vshrl.u32 %v1693, 7
        %v1695 = vsub.s32 0, %v1694
        %v1696 = vrot.slane %v1692, %v1695
        %v1697 = vmul.f32 %v1676, %v1696
        %v1698 = vmul.f32 %v1677, %v1696
        %v1699 = vmul.f32 %v1678, %v1696
        %v1700 = vmul.f32 %v1679, %v1696
        %v1701 = vmul.f32 %v1680, %v1696
        %v1702 = vmul.f32 %v1681, %v1696
        %v1703 = vmul.f32 %v1682, %v1696
        %v1704 = vmul.f32 %v1683, %v1696
        %v1705 = vmul.f32 %v1684, %v1696
        %v1706 = vmul.f32 %v1685, %v1696
        %v1707 = vmul.f32 %v1686, %v1696
        %v1708 = vmul.f32 %v1687, %v1696
        %v1709 = vmul.f32 %v1688, %v1696
        %v1710 = vmul.f32 %v1689, %v1696
        %v1711 = vmul.f32 %v1690, %v1696
        %v1712 = vmul.f32 %v1691, %v1696
        %v1713 = vld [vmem:[%s2 + $0x1] sm:$0x1]
        %v1714 = vlaneseq
        %v1715 = vshrl.u32 %v1714, 7
        %v1716 = vsub.s32 0, %v1715
        %v1717 = vrot.slane %v1713, %v1716
        %v1718 = vadd.f32 %v1697, %v1717
        %v1719 = vadd.f32 %v1698, %v1717
        %v1720 = vadd.f32 %v1699, %v1717
        %v1721 = vadd.f32 %v1700, %v1717
        %v1722 = vadd.f32 %v1701, %v1717
        %v1723 = vadd.f32 %v1702, %v1717
        %v1724 = vadd.f32 %v1703, %v1717
        %v1725 = vadd.f32 %v1704, %v1717
        %v1726 = vadd.f32 %v1705, %v1717
        %v1727 = vadd.f32 %v1706, %v1717
        %v1728 = vadd.f32 %v1707, %v1717
        %v1729 = vadd.f32 %v1708, %v1717
        %v1730 = vadd.f32 %v1709, %v1717
        %v1731 = vadd.f32 %v1710, %v1717
        %v1732 = vadd.f32 %v1711, %v1717
        %v1733 = vadd.f32 %v1712, %v1717
        %v1734 = vmax.f32 %v1718, 0.0
        %v1735 = vmax.f32 %v1719, 0.0
        %v1736 = vmax.f32 %v1720, 0.0
        %v1737 = vmax.f32 %v1721, 0.0
        %v1738 = vmax.f32 %v1722, 0.0
        %v1739 = vmax.f32 %v1723, 0.0
        %v1740 = vmax.f32 %v1724, 0.0
        %v1741 = vmax.f32 %v1725, 0.0
        %v1742 = vmax.f32 %v1726, 0.0
        %v1743 = vmax.f32 %v1727, 0.0
        %v1744 = vmax.f32 %v1728, 0.0
        %v1745 = vmax.f32 %v1729, 0.0
        %v1746 = vmax.f32 %v1730, 0.0
        %v1747 = vmax.f32 %v1731, 0.0
        %v1748 = vmax.f32 %v1732, 0.0
        %v1749 = vmax.f32 %v1733, 0.0
        %1750 = vst [vmem:[%s163] sm:$0xff] %v1734
        %1751 = vst [vmem:[%s163 + $0x8] sm:$0xf] %v1735
        %1752 = vst [vmem:[%s163 + $0x10] sm:$0xff] %v1736
        %1753 = vst [vmem:[%s163 + $0x18] sm:$0xf] %v1737
        %1754 = vst [vmem:[%s163 + $0x20] sm:$0xff] %v1738
        %1755 = vst [vmem:[%s163 + $0x28] sm:$0xf] %v1739
        %1756 = vst [vmem:[%s163 + $0x30] sm:$0xff] %v1740
        %1757 = vst [vmem:[%s163 + $0x38] sm:$0xf] %v1741
        %1758 = vst [vmem:[%s163 + $0x40] sm:$0xff] %v1742
        %1759 = vst [vmem:[%s163 + $0x48] sm:$0xf] %v1743
        %1760 = vst [vmem:[%s163 + $0x50] sm:$0xff] %v1744
        %1761 = vst [vmem:[%s163 + $0x58] sm:$0xf] %v1745
        %1762 = vst [vmem:[%s163 + $0x60] sm:$0xff] %v1746
        %1763 = vst [vmem:[%s163 + $0x68] sm:$0xf] %v1747
        %1764 = vst [vmem:[%s163 + $0x70] sm:$0xff] %v1748
        %1765 = vst [vmem:[%s163 + $0x78] sm:$0xf] %v1749
        %s1766 = smul.u32 8, %s20
        %p1767 = scmp.lt.s32.totalorder %s19, 1
        %s1768 = scalar_select %p1767, %s19, 1
        %p1769 = scmp.lt.s32.totalorder %s1766, 7
        %s1770 = scalar_select %p1769, %s1766, 7
        %s1771 = smul.addr %s1770, 2
        %s1772 = smul.addr %s1768, 16
        %s1773 = sadd.s32 %s1771, %s1772
        %s1774 = smul.addr %s1773, 8
        %s1775 = scalar_lea.vmem %s3, %s1774
        // Predicated region
        $region109: #{tpu_custom_call.1} parent=27 // pred_check
          %p1776 = pneg %p89
        $region110: #{tpu_custom_call.1} parent=27 // pred_check_branch
          %1778 = sbr.rel (%p1776) target = $region112
        $region111: #{tpu_custom_call.1} parent=27 // pred_region
          %s1779 = smul.u32 8, %s20
        $region112: #{tpu_custom_call.1} parent=27 // pred_fallthru
          _
      $region28: #{tpu_custom_call.1} parent=5 // pred_fallthru
        _
      %p1780 = scmp.le.s32.totalorder 2, %s10
      // Predicated region
      $region113: #{tpu_custom_call.1} parent=5 // pred_check
        %p1781 = pneg %p1780
      $region114: #{tpu_custom_call.1} parent=5 // pred_check_branch
        %1783 = sbr.rel (%p1781) target = $region116
      $region115: #{tpu_custom_call.1} parent=5 // pred_region
        %s1784 = ssub.s32 %s10, 2
        // Predicated region
        $region117: #{tpu_custom_call.1} parent=115 // pred_check
          %p1785 = pneg %p95
        $region118: #{tpu_custom_call.1} parent=115 // pred_check_branch
          %1787 = sbr.rel (%p1785) target = $region120
        $region119: #{tpu_custom_call.1} parent=115 // pred_region
          %s1788 = smul.u32 8, %s22
          %p1789 = scmp.lt.s32.totalorder %s21, 1
          %s1790 = scalar_select %p1789, %s21, 1
          %p1791 = scmp.lt.s32.totalorder %s1788, 7
          %s1792 = scalar_select %p1791, %s1788, 7
          %s1793 = smul.addr %s1792, 2
          %s1794 = smul.addr %s1790, 16
          %s1795 = sadd.s32 %s1793, %s1794
          %s1796 = smul.addr %s1795, 8
          %s1797 = scalar_lea.vmem %s3, %s1796
        $region120: #{tpu_custom_call.1} parent=115 // pred_fallthru
          _
      $region116: #{tpu_custom_call.1} parent=5 // pred_fallthru
        _
    $region6: #{tpu_custom_call.1} parent=1 // loop_footer
      %s14 = sadd.s32 1, %s10
    $region7: #{tpu_custom_call.1} parent=1 // loop_footer_branch
      %9 = sbr.rel target = $region3
    $region8: #{tpu_custom_call.1} parent=1 // loop_exit
      _
    %1798 = vsyncpa [#allocation6], 1
    %s1799 = scalar_lea.sflag [#allocation6], 1
    %1800 = vsyncpa %s1799, 1
  %1801 = vsyncmov [#allocation4]
  %s1802 = vpop.sfrf %1801
  %p1803 = scmp.eq.s32.totalorder %s1802, 0
  %p1804 = pneg %p1803
  %1806 = shalt.err (%p1804)
  %s1807 = scalar_lea.sflag [#allocation4], 1
  %1808 = vsyncmov %s1807
  %s1809 = vpop.sfrf %1808
  %p1810 = scmp.eq.s32.totalorder %s1809, 0
  %p1811 = pneg %p1810
  %1813 = shalt.err (%p1811)

</llo_original>
